<compile_context>
chip_gen: v7x
topology: tpu7x:2x2x1
jax: 0.10.0
libtpu: 0.0.40
codegen_flags: <defaults>
</compile_context>

<pallas_src>
import functools
import math

import jax
import jax.numpy as jnp
from jax.experimental import pallas as pl
from jax.experimental.pallas import tpu as pltpu

BF16 = jnp.bfloat16


# ----------------------------- shared helpers --------------------------------
def _layer_norm(x, gamma, beta, eps=1e-6):
    """f32 LayerNorm over the last axis (matches nn.LayerNorm(eps=1e-6))."""
    mu = jnp.mean(x, axis=-1, keepdims=True)
    xc = x - mu
    var = jnp.mean(xc * xc, axis=-1, keepdims=True)
    return xc * jax.lax.rsqrt(var + eps) * gamma + beta


# ----------------------------- fused Pallas kernel ----------------------------
def _encoder_kernel(n_heads, d_k,
                    x_ref, pos_ref, g0_ref, b0_ref, mask_ref,
                    wqkv_ref, wfc_ref, g1_ref, be1_ref,
                    w1_ref, b1_ref, w2_ref, b2_ref, g2_ref, be2_ref,
                    o_ref, act_ref):
    """Grid = (batch, layer).  One batch element, one transformer layer."""
    layer = pl.program_id(1)
    d_model = x_ref.shape[-1]
    scale = 1.0 / math.sqrt(d_k)

    # ---- prologue (pos-emb add + LayerNorm) at the first layer iteration ----
    @pl.when(layer == 0)
    def _():
        x0 = x_ref[0] + pos_ref[...]                        # (S, D) f32
        act_ref[...] = _layer_norm(x0, g0_ref[...], b0_ref[...])
        # dropout(p) -> identity at inference

    x = act_ref[...]                                        # (S, D) f32
    xb = x.astype(BF16)
    mask = mask_ref[0, 0]                                   # (S, S) f32

    # ---- MultiHeadedAttention ----
    # Fused lane-dense QKV projection: one (S, D) @ (D, 3D) matmul.
    qkv = jnp.dot(xb, wqkv_ref[0], preferred_element_type=jnp.float32)  # (S, 3D)

    def split_heads(off):
        # (H, S, d_k): stack of static lane slices (no major-dim transpose).
        return jnp.stack(
            [qkv[:, off + h * d_k: off + (h + 1) * d_k] for h in range(n_heads)],
            axis=0)

    q = split_heads(0)                                      # (H, S, d_k) f32
    k = split_heads(d_model)
    v = split_heads(2 * d_model)

    # Head-batched scores / softmax / context.
    s = jnp.einsum('hqd,hkd->hqk', q.astype(BF16), k.astype(BF16),
                   preferred_element_type=jnp.float32)      # (H, S, S)
    s = s * scale + mask[None]
    m = jnp.max(s, axis=-1, keepdims=True)
    e = jnp.exp(s - m)
    p = e * pl.reciprocal(jnp.sum(e, axis=-1, keepdims=True), approx=True)
    # attention dropout -> identity at inference
    ctx = jnp.einsum('hqk,hkd->hqd', p.astype(BF16), v.astype(BF16),
                     preferred_element_type=jnp.float32)    # (H, S, d_k)

    # concat heads -> single K = d_model output projection.
    ctx_flat = jnp.concatenate([ctx[h] for h in range(n_heads)], axis=-1)  # (S, D)
    attn = jnp.dot(ctx_flat.astype(BF16), wfc_ref[0],
                   preferred_element_type=jnp.float32)      # (S, D)

    # residual + LayerNorm 1
    y = _layer_norm(x + attn, g1_ref[0], be1_ref[0])        # (S, D) f32

    # ---- PositionwiseFeedForward: w2(relu(w1(y))) ----
    h1 = jnp.dot(y.astype(BF16), w1_ref[0],
                 preferred_element_type=jnp.float32) + b1_ref[0]
    h1 = jnp.maximum(h1, 0.0)
    f = jnp.dot(h1.astype(BF16), w2_ref[0],
                preferred_element_type=jnp.float32) + b2_ref[0]

    # residual + LayerNorm 2 -> carry for next layer
    out = _layer_norm(y + f, g2_ref[0], be2_ref[0])
    act_ref[...] = out

    @pl.when(layer == pl.num_programs(1) - 1)
    def _():
        o_ref[0] = out.astype(o_ref.dtype)


# ----------------------------- wrapper ---------------------------------------
def transformer_encoder_forward(input_embs, log_mask, att_mask, params, *, n_heads):
    """Matches TransformerEncoder.forward (dropout = identity at inference)."""
    del log_mask  # only its length (== S) is used by the original forward
    B, S, D = input_embs.shape
    n_layers, _, d_ff = params["w1"].shape
    d_k = D // n_heads
    # position_ids = arange(S) -> lookup is the first S rows of the table.
    pos = params["pos_emb"][:S]

    kernel = functools.partial(_encoder_kernel, n_heads, d_k)
    x_map = lambda b, l: (b, 0, 0)
    res2 = lambda b, l: (0, 0)           # resident across the whole grid
    lay3 = lambda b, l: (l, 0, 0)        # per-layer weight slab

    return pl.pallas_call(
        kernel,
        out_shape=jax.ShapeDtypeStruct((B, S, D), input_embs.dtype),
        grid=(B, n_layers),
        in_specs=[
            pl.BlockSpec((1, S, D), x_map),                         # input_embs
            pl.BlockSpec((S, D), res2),                             # pos table
            pl.BlockSpec((1, D), res2),                             # LN0 gamma
            pl.BlockSpec((1, D), res2),                             # LN0 beta
            pl.BlockSpec((1, 1, S, S), lambda b, l: (b, 0, 0, 0)),  # att_mask
            pl.BlockSpec((1, D, 3 * D), lay3),                      # Wqkv (bf16)
            pl.BlockSpec((1, D, D), lay3),                          # Wfc  (bf16)
            pl.BlockSpec((1, 1, D), lay3),                          # LN1 gamma
            pl.BlockSpec((1, 1, D), lay3),                          # LN1 beta
            pl.BlockSpec((1, D, d_ff), lay3),                       # W1   (bf16)
            pl.BlockSpec((1, 1, d_ff), lay3),                       # b1   (f32)
            pl.BlockSpec((1, d_ff, D), lay3),                       # W2   (bf16)
            pl.BlockSpec((1, 1, D), lay3),                          # b2   (f32)
            pl.BlockSpec((1, 1, D), lay3),                          # LN2 gamma
            pl.BlockSpec((1, 1, D), lay3),                          # LN2 beta
        ],
        out_specs=pl.BlockSpec((1, S, D), x_map),
        scratch_shapes=[pltpu.VMEM((S, D), jnp.float32)],           # act carry
        compiler_params=pltpu.CompilerParams(
            dimension_semantics=("parallel", "arbitrary")),
    )(input_embs, pos, params["g0"], params["b0"], att_mask,
      params["wqkv"], params["wfc"], params["g1"], params["be1"],
      params["w1"], params["b1"], params["w2"], params["b2"],
      params["g2"], params["be2"])


# ----------------------------- pure-JAX reference ------------------------------
def _ln_ref(x, g, b, eps=1e-6):
    mu = jnp.mean(x, -1, keepdims=True)
    xc = x - mu
    var = jnp.mean(xc * xc, -1, keepdims=True)
    return xc * jax.lax.rsqrt(var + eps) * g + b


def encoder_ref(input_embs, att_mask, params, *, n_heads):
    """Standard multi-head formulation, same bf16 cast points as the kernel."""
    B, S, D = input_embs.shape
    H, d_k = n_heads, D // n_heads
    x = _ln_ref(input_embs + params["pos_emb"][None, :S],
                params["g0"], params["b0"])
    n_layers = params["wqkv"].shape[0]
    for li in range(n_layers):
        xb = x.astype(BF16)
        qkv = jnp.einsum('bsd,de->bse', xb, params["wqkv"][li],
                         preferred_element_type=jnp.float32)
        q, k, v = qkv[..., :D], qkv[..., D:2 * D], qkv[..., 2 * D:]
        qh = q.reshape(B, S, H, d_k).transpose(0, 2, 1, 3)
        kh = k.reshape(B, S, H, d_k).transpose(0, 2, 1, 3)
        vh = v.reshape(B, S, H, d_k).transpose(0, 2, 1, 3)
        s = jnp.einsum('bhqd,bhkd->bhqk', qh.astype(BF16), kh.astype(BF16),
                       preferred_element_type=jnp.float32) / math.sqrt(d_k)
        s = s + att_mask
        p = jax.nn.softmax(s, axis=-1)
        ctx = jnp.einsum('bhqk,bhkd->bhqd', p.astype(BF16), vh.astype(BF16),
                         preferred_element_type=jnp.float32)
        ctx = ctx.transpose(0, 2, 1, 3).reshape(B, S, D)
        a = jnp.einsum('bsd,de->bse', ctx.astype(BF16), params["wfc"][li],
                       preferred_element_type=jnp.float32)
        y = _ln_ref(x + a, params["g1"][li], params["be1"][li])
        h = jnp.maximum(
            jnp.einsum('bsd,df->bsf', y.astype(BF16), params["w1"][li],
                       preferred_element_type=jnp.float32) + params["b1"][li], 0.0)
        f = jnp.einsum('bsf,fd->bsd', h.astype(BF16), params["w2"][li],
                       preferred_element_type=jnp.float32) + params["b2"][li]
        x = _ln_ref(y + f, params["g2"][li], params["be2"][li])
    return x


# ----------------------------- parameters --------------------------------------
def init_params(key, *, n_layers, n_position, d_model, n_heads, d_ff):
    keys = jax.random.split(key, 1 + n_layers)

    def wgt(k, shape, scale=0.05):
        return (scale * jax.random.normal(k, shape, jnp.float32)).astype(BF16)

    params = {
        "pos_emb": 0.02 * jax.random.normal(keys[0], (n_position, d_model),
                                            jnp.float32),
        "g0": jnp.ones((1, d_model), jnp.float32),
        "b0": jnp.zeros((1, d_model), jnp.float32),
    }
    wqkv, wfc, g1, be1, w1, b1, w2, b2, g2, be2 = ([] for _ in range(10))
    for li in range(n_layers):
        ks = jax.random.split(keys[1 + li], 10)
        wqkv.append(wgt(ks[0], (d_model, 3 * d_model)))
        wfc.append(wgt(ks[1], (d_model, d_model)))
        g1.append(1.0 + 0.1 * jax.random.normal(ks[2], (1, d_model), jnp.float32))
        be1.append(0.1 * jax.random.normal(ks[3], (1, d_model), jnp.float32))
        w1.append(wgt(ks[4], (d_model, d_ff)))
        b1.append(0.1 * jax.random.normal(ks[5], (1, d_ff), jnp.float32))
        w2.append(wgt(ks[6], (d_ff, d_model)))
        b2.append(0.1 * jax.random.normal(ks[7], (1, d_model), jnp.float32))
        g2.append(1.0 + 0.1 * jax.random.normal(ks[8], (1, d_model), jnp.float32))
        be2.append(0.1 * jax.random.normal(ks[9], (1, d_model), jnp.float32))
    params.update(
        wqkv=jnp.stack(wqkv), wfc=jnp.stack(wfc),
        g1=jnp.stack(g1), be1=jnp.stack(be1),
        w1=jnp.stack(w1), b1=jnp.stack(b1),
        w2=jnp.stack(w2), b2=jnp.stack(b2),
        g2=jnp.stack(g2), be2=jnp.stack(be2))
    return params


# ----------------------------------- main ---------------------------------------
if __name__ == "__main__":
    # Small but lane-dense shapes: d_model and d_inner are multiples of 128.
    B, S = 2, 16
    d_model, n_heads, n_layers = 128, 4, 2
    d_ff = 4 * d_model
    n_position = 32

    key = jax.random.PRNGKey(0)
    k_x, k_p = jax.random.split(key)

    input_embs = jax.random.normal(k_x, (B, S, d_model), jnp.float32)
    log_mask = jnp.ones((B, S), jnp.int32)
    causal = jnp.tril(jnp.ones((S, S), jnp.float32))
    att_mask = jnp.asarray(
        jnp.broadcast_to(jnp.where(causal > 0, 0.0, -1e9)[None, None],
                         (B, 1, S, S)), jnp.float32)

    params = init_params(k_p, n_layers=n_layers, n_position=n_position,
                         d_model=d_model, n_heads=n_heads, d_ff=d_ff)

    out = transformer_encoder_forward(input_embs, log_mask, att_mask, params,
                                      n_heads=n_heads)
    jax.block_until_ready(out)

    ref = encoder_ref(input_embs, att_mask, params, n_heads=n_heads)
    max_err = float(jnp.max(jnp.abs(out - ref)))
    assert jnp.allclose(out, ref, atol=2e-2, rtol=2e-2), \
        f"mismatch vs reference (max abs err {max_err})"
    print("KERNEL_OK")
</pallas_src>

<mosaic_0001>
module attributes {stable_mosaic.version = 11 : i64} {
  func.func @_encoder_kernel(%arg0: i32, %arg1: i32, %arg2: memref<1x16x128xf32, #tpu.memory_space<vmem>>, %arg3: memref<16x128xf32, #tpu.memory_space<vmem>>, %arg4: memref<1x128xf32, #tpu.memory_space<vmem>>, %arg5: memref<1x128xf32, #tpu.memory_space<vmem>>, %arg6: memref<1x1x16x16xf32, #tpu.memory_space<vmem>>, %arg7: memref<1x128x384xbf16, #tpu.memory_space<vmem>>, %arg8: memref<1x128x128xbf16, #tpu.memory_space<vmem>>, %arg9: memref<1x1x128xf32, #tpu.memory_space<vmem>>, %arg10: memref<1x1x128xf32, #tpu.memory_space<vmem>>, %arg11: memref<1x128x512xbf16, #tpu.memory_space<vmem>>, %arg12: memref<1x1x512xf32, #tpu.memory_space<vmem>>, %arg13: memref<1x512x128xbf16, #tpu.memory_space<vmem>>, %arg14: memref<1x1x128xf32, #tpu.memory_space<vmem>>, %arg15: memref<1x1x128xf32, #tpu.memory_space<vmem>>, %arg16: memref<1x1x128xf32, #tpu.memory_space<vmem>>, %arg17: memref<1x16x128xf32, #tpu.memory_space<vmem>>, %arg18: memref<16x128xf32, #tpu.memory_space<vmem>>) attributes {dimension_semantics = [#tpu.dimension_semantics<parallel>, #tpu.dimension_semantics<arbitrary>], iteration_bounds = array<i64: 2, 2>, scalar_prefetch = 0 : i64, scratch_operands = 1 : i64, tpu.core_type = #tpu.core_type<tc>, window_params = [{transform_indices = @transform_0, window_bounds = array<i64: 1, 16, 128>}, {pipeline_mode = #tpu.pipeline_mode<synchronous>, transform_indices = @transform_1, window_bounds = array<i64: 16, 128>}, {pipeline_mode = #tpu.pipeline_mode<synchronous>, transform_indices = @transform_2, window_bounds = array<i64: 1, 128>}, {pipeline_mode = #tpu.pipeline_mode<synchronous>, transform_indices = @transform_3, window_bounds = array<i64: 1, 128>}, {transform_indices = @transform_4, window_bounds = array<i64: 1, 1, 16, 16>}, {transform_indices = @transform_5, window_bounds = array<i64: 1, 128, 384>}, {transform_indices = @transform_6, window_bounds = array<i64: 1, 128, 128>}, {transform_indices = @transform_7, window_bounds = array<i64: 1, 1, 128>}, {transform_indices = @transform_8, window_bounds = array<i64: 1, 1, 128>}, {transform_indices = @transform_9, window_bounds = array<i64: 1, 128, 512>}, {transform_indices = @transform_10, window_bounds = array<i64: 1, 1, 512>}, {transform_indices = @transform_11, window_bounds = array<i64: 1, 512, 128>}, {transform_indices = @transform_12, window_bounds = array<i64: 1, 1, 128>}, {transform_indices = @transform_13, window_bounds = array<i64: 1, 1, 128>}, {transform_indices = @transform_14, window_bounds = array<i64: 1, 1, 128>}, {transform_indices = @transform_15, window_bounds = array<i64: 1, 16, 128>}]} {
    %c0_i32 = arith.constant 0 : i32
    %0 = arith.cmpi eq, %arg1, %c0_i32 : i32
    %1 = arith.extui %0 : i1 to i32
    %c0_i32_0 = arith.constant 0 : i32
    %2 = arith.cmpi ne, %1, %c0_i32_0 : i32
    scf.if %2 {
      %c0_58 = arith.constant 0 : index
      %c0_59 = arith.constant 0 : index
      %c0_60 = arith.constant 0 : index
      %143 = vector.load %arg2[%c0_58, %c0_59, %c0_60] : memref<1x16x128xf32, #tpu.memory_space<vmem>>, vector<1x16x128xf32>
      %144 = vector.shape_cast %143 : vector<1x16x128xf32> to vector<16x128xf32>
      %c0_61 = arith.constant 0 : index
      %c0_62 = arith.constant 0 : index
      %145 = vector.load %arg3[%c0_61, %c0_62] : memref<16x128xf32, #tpu.memory_space<vmem>>, vector<16x128xf32>
      %146 = arith.addf %144, %145 : vector<16x128xf32>
      %c0_63 = arith.constant 0 : index
      %c0_64 = arith.constant 0 : index
      %147 = vector.load %arg4[%c0_63, %c0_64] : memref<1x128xf32, #tpu.memory_space<vmem>>, vector<1x128xf32>
      %c0_65 = arith.constant 0 : index
      %c0_66 = arith.constant 0 : index
      %148 = vector.load %arg5[%c0_65, %c0_66] : memref<1x128xf32, #tpu.memory_space<vmem>>, vector<1x128xf32>
      %cst_67 = arith.constant dense<0.000000e+00> : vector<16xf32>
      %149 = vector.multi_reduction <add>, %146, %cst_67 [1] : vector<16x128xf32> to vector<16xf32>
      %150 = vector.shape_cast %149 : vector<16xf32> to vector<16x1xf32>
      %cst_68 = arith.constant 1.280000e+02 : f32
      %151 = vector.broadcast %cst_68 : f32 to vector<16x1xf32>
      %152 = arith.divf %150, %151 : vector<16x1xf32>
      %153 = vector.broadcast %152 : vector<16x1xf32> to vector<16x128xf32>
      %154 = arith.subf %146, %153 : vector<16x128xf32>
      %155 = arith.mulf %154, %154 : vector<16x128xf32>
      %cst_69 = arith.constant dense<0.000000e+00> : vector<16xf32>
      %156 = vector.multi_reduction <add>, %155, %cst_69 [1] : vector<16x128xf32> to vector<16xf32>
      %157 = vector.shape_cast %156 : vector<16xf32> to vector<16x1xf32>
      %cst_70 = arith.constant 1.280000e+02 : f32
      %158 = vector.broadcast %cst_70 : f32 to vector<16x1xf32>
      %159 = arith.divf %157, %158 : vector<16x1xf32>
      %cst_71 = arith.constant 9.99999997E-7 : f32
      %160 = vector.broadcast %cst_71 : f32 to vector<16x1xf32>
      %161 = arith.addf %159, %160 : vector<16x1xf32>
      %162 = math.rsqrt %161 : vector<16x1xf32>
      %163 = vector.broadcast %162 : vector<16x1xf32> to vector<16x128xf32>
      %164 = arith.mulf %154, %163 : vector<16x128xf32>
      %165 = vector.broadcast %147 : vector<1x128xf32> to vector<16x128xf32>
      %166 = arith.mulf %164, %165 : vector<16x128xf32>
      %167 = vector.broadcast %148 : vector<1x128xf32> to vector<16x128xf32>
      %168 = arith.addf %166, %167 : vector<16x128xf32>
      %c0_72 = arith.constant 0 : index
      %c0_73 = arith.constant 0 : index
      %169 = vector.load %arg18[%c0_72, %c0_73] : memref<16x128xf32, #tpu.memory_space<vmem>>, vector<16x128xf32>
      tpu.vector_store %arg18[%c0_72, %c0_73], %168 {strides = array<i32>} : memref<16x128xf32, #tpu.memory_space<vmem>>, vector<16x128xf32>,
    } else {
    }
    %c0 = arith.constant 0 : index
    %c0_1 = arith.constant 0 : index
    %3 = vector.load %arg18[%c0, %c0_1] : memref<16x128xf32, #tpu.memory_space<vmem>>, vector<16x128xf32>
    %4 = arith.truncf %3 : vector<16x128xf32> to vector<16x128xbf16>
    %c0_2 = arith.constant 0 : index
    %c0_3 = arith.constant 0 : index
    %c0_4 = arith.constant 0 : index
    %c0_5 = arith.constant 0 : index
    %5 = vector.load %arg6[%c0_2, %c0_3, %c0_4, %c0_5] : memref<1x1x16x16xf32, #tpu.memory_space<vmem>>, vector<1x1x16x16xf32>
    %6 = vector.shape_cast %5 : vector<1x1x16x16xf32> to vector<16x16xf32>
    %c0_6 = arith.constant 0 : index
    %c0_7 = arith.constant 0 : index
    %c0_8 = arith.constant 0 : index
    %7 = vector.load %arg7[%c0_6, %c0_7, %c0_8] : memref<1x128x384xbf16, #tpu.memory_space<vmem>>, vector<1x128x384xbf16>
    %8 = vector.shape_cast %7 : vector<1x128x384xbf16> to vector<128x384xbf16>
    %cst = arith.constant dense<0.000000e+00> : vector<16x384xf32>
    %9 = tpu.matmul %4, %8, %cst {dimension_numbers = #tpu.dot_dimension_numbers<[1], [0], [0], [1], [0, 0, 1, 1], [], []>} : vector<16x128xbf16>, vector<128x384xbf16>, vector<16x384xf32> -> vector<16x384xf32>
    %10 = vector.extract_strided_slice %9 {offsets = [0, 0], sizes = [16, 32], strides = [1, 1]} : vector<16x384xf32> to vector<16x32xf32>
    %11 = vector.extract_strided_slice %9 {offsets = [0, 32], sizes = [16, 32], strides = [1, 1]} : vector<16x384xf32> to vector<16x32xf32>
    %12 = vector.extract_strided_slice %9 {offsets = [0, 64], sizes = [16, 32], strides = [1, 1]} : vector<16x384xf32> to vector<16x32xf32>
    %13 = vector.extract_strided_slice %9 {offsets = [0, 96], sizes = [16, 32], strides = [1, 1]} : vector<16x384xf32> to vector<16x32xf32>
    %14 = vector.shape_cast %10 : vector<16x32xf32> to vector<1x16x32xf32>
    %15 = vector.shape_cast %11 : vector<16x32xf32> to vector<1x16x32xf32>
    %16 = vector.shape_cast %12 : vector<16x32xf32> to vector<1x16x32xf32>
    %17 = vector.shape_cast %13 : vector<16x32xf32> to vector<1x16x32xf32>
    %18 = tpu.concatenate %14, %15, %16, %17 in 0 : vector<1x16x32xf32>, vector<1x16x32xf32>, vector<1x16x32xf32>, vector<1x16x32xf32> -> vector<4x16x32xf32>
    %19 = vector.extract_strided_slice %9 {offsets = [0, 128], sizes = [16, 32], strides = [1, 1]} : vector<16x384xf32> to vector<16x32xf32>
    %20 = vector.extract_strided_slice %9 {offsets = [0, 160], sizes = [16, 32], strides = [1, 1]} : vector<16x384xf32> to vector<16x32xf32>
    %21 = vector.extract_strided_slice %9 {offsets = [0, 192], sizes = [16, 32], strides = [1, 1]} : vector<16x384xf32> to vector<16x32xf32>
    %22 = vector.extract_strided_slice %9 {offsets = [0, 224], sizes = [16, 32], strides = [1, 1]} : vector<16x384xf32> to vector<16x32xf32>
    %23 = vector.shape_cast %19 : vector<16x32xf32> to vector<1x16x32xf32>
    %24 = vector.shape_cast %20 : vector<16x32xf32> to vector<1x16x32xf32>
    %25 = vector.shape_cast %21 : vector<16x32xf32> to vector<1x16x32xf32>
    %26 = vector.shape_cast %22 : vector<16x32xf32> to vector<1x16x32xf32>
    %27 = tpu.concatenate %23, %24, %25, %26 in 0 : vector<1x16x32xf32>, vector<1x16x32xf32>, vector<1x16x32xf32>, vector<1x16x32xf32> -> vector<4x16x32xf32>
    %28 = vector.extract_strided_slice %9 {offsets = [0, 256], sizes = [16, 32], strides = [1, 1]} : vector<16x384xf32> to vector<16x32xf32>
    %29 = vector.extract_strided_slice %9 {offsets = [0, 288], sizes = [16, 32], strides = [1, 1]} : vector<16x384xf32> to vector<16x32xf32>
    %30 = vector.extract_strided_slice %9 {offsets = [0, 320], sizes = [16, 32], strides = [1, 1]} : vector<16x384xf32> to vector<16x32xf32>
    %31 = vector.extract_strided_slice %9 {offsets = [0, 352], sizes = [16, 32], strides = [1, 1]} : vector<16x384xf32> to vector<16x32xf32>
    %32 = vector.shape_cast %28 : vector<16x32xf32> to vector<1x16x32xf32>
    %33 = vector.shape_cast %29 : vector<16x32xf32> to vector<1x16x32xf32>
    %34 = vector.shape_cast %30 : vector<16x32xf32> to vector<1x16x32xf32>
    %35 = vector.shape_cast %31 : vector<16x32xf32> to vector<1x16x32xf32>
    %36 = tpu.concatenate %32, %33, %34, %35 in 0 : vector<1x16x32xf32>, vector<1x16x32xf32>, vector<1x16x32xf32>, vector<1x16x32xf32> -> vector<4x16x32xf32>
    %37 = arith.truncf %18 : vector<4x16x32xf32> to vector<4x16x32xbf16>
    %38 = arith.truncf %27 : vector<4x16x32xf32> to vector<4x16x32xbf16>
    "tpu.trace_start"() <{level = 10 : i32, message = "hqd,hkd->hqk"}> : () -> ()
    %cst_9 = arith.constant dense<0.000000e+00> : vector<4x16x16xf32>
    %39 = tpu.matmul %37, %38, %cst_9 {dimension_numbers = #tpu.dot_dimension_numbers<[2], [2], [1], [1], [0, 0, 0, 1, 1, 1], [0], [0]>} : vector<4x16x32xbf16>, vector<4x16x32xbf16>, vector<4x16x16xf32> -> vector<4x16x16xf32>
    "tpu.trace_stop"() : () -> ()
    %cst_10 = arith.constant 0.176776692 : f32
    %40 = vector.broadcast %cst_10 : f32 to vector<4x16x16xf32>
    %41 = arith.mulf %39, %40 : vector<4x16x16xf32>
    %42 = vector.shape_cast %6 : vector<16x16xf32> to vector<1x16x16xf32>
    %43 = vector.broadcast %42 : vector<1x16x16xf32> to vector<4x16x16xf32>
    %44 = arith.addf %41, %43 : vector<4x16x16xf32>
    %cst_11 = arith.constant dense<0xFF800000> : vector<4x16xf32>
    %45 = vector.multi_reduction <maximumf>, %44, %cst_11 [2] : vector<4x16x16xf32> to vector<4x16xf32>
    %46 = vector.shape_cast %45 : vector<4x16xf32> to vector<4x16x1xf32>
    %47 = vector.broadcast %46 : vector<4x16x1xf32> to vector<4x16x16xf32>
    %48 = arith.subf %44, %47 : vector<4x16x16xf32>
    %49 = math.exp %48 : vector<4x16x16xf32>
    %cst_12 = arith.constant dense<0.000000e+00> : vector<4x16xf32>
    %50 = vector.multi_reduction <add>, %49, %cst_12 [2] : vector<4x16x16xf32> to vector<4x16xf32>
    %51 = vector.shape_cast %50 : vector<4x16xf32> to vector<4x16x1xf32>
    %52 = tpu.reciprocal %51 {approx = true} : vector<4x16x1xf32> -> vector<4x16x1xf32>
    %53 = vector.broadcast %52 : vector<4x16x1xf32> to vector<4x16x16xf32>
    %54 = arith.mulf %49, %53 : vector<4x16x16xf32>
    %55 = arith.truncf %54 : vector<4x16x16xf32> to vector<4x16x16xbf16>
    %56 = arith.truncf %36 : vector<4x16x32xf32> to vector<4x16x32xbf16>
    "tpu.trace_start"() <{level = 10 : i32, message = "hqk,hkd->hqd"}> : () -> ()
    %cst_13 = arith.constant dense<0.000000e+00> : vector<4x16x32xf32>
    %57 = tpu.matmul %55, %56, %cst_13 {dimension_numbers = #tpu.dot_dimension_numbers<[2], [1], [1], [2], [0, 0, 0, 1, 1, 2], [0], [0]>} : vector<4x16x16xbf16>, vector<4x16x32xbf16>, vector<4x16x32xf32> -> vector<4x16x32xf32>
    "tpu.trace_stop"() : () -> ()
    %58 = vector.extract_strided_slice %57 {offsets = [0, 0, 0], sizes = [1, 16, 32], strides = [1, 1, 1]} : vector<4x16x32xf32> to vector<1x16x32xf32>
    %59 = vector.shape_cast %58 : vector<1x16x32xf32> to vector<16x32xf32>
    %60 = vector.extract_strided_slice %57 {offsets = [1, 0, 0], sizes = [1, 16, 32], strides = [1, 1, 1]} : vector<4x16x32xf32> to vector<1x16x32xf32>
    %61 = vector.shape_cast %60 : vector<1x16x32xf32> to vector<16x32xf32>
    %62 = vector.extract_strided_slice %57 {offsets = [2, 0, 0], sizes = [1, 16, 32], strides = [1, 1, 1]} : vector<4x16x32xf32> to vector<1x16x32xf32>
    %63 = vector.shape_cast %62 : vector<1x16x32xf32> to vector<16x32xf32>
    %64 = vector.extract_strided_slice %57 {offsets = [3, 0, 0], sizes = [1, 16, 32], strides = [1, 1, 1]} : vector<4x16x32xf32> to vector<1x16x32xf32>
    %65 = vector.shape_cast %64 : vector<1x16x32xf32> to vector<16x32xf32>
    %66 = tpu.concatenate %59, %61, %63, %65 in 1 : vector<16x32xf32>, vector<16x32xf32>, vector<16x32xf32>, vector<16x32xf32> -> vector<16x128xf32>
    %67 = arith.truncf %66 : vector<16x128xf32> to vector<16x128xbf16>
    %c0_14 = arith.constant 0 : index
    %c0_15 = arith.constant 0 : index
    %c0_16 = arith.constant 0 : index
    %68 = vector.load %arg8[%c0_14, %c0_15, %c0_16] : memref<1x128x128xbf16, #tpu.memory_space<vmem>>, vector<1x128x128xbf16>
    %69 = vector.shape_cast %68 : vector<1x128x128xbf16> to vector<128x128xbf16>
    %cst_17 = arith.constant dense<0.000000e+00> : vector<16x128xf32>
    %70 = tpu.matmul %67, %69, %cst_17 {dimension_numbers = #tpu.dot_dimension_numbers<[1], [0], [0], [1], [0, 0, 1, 1], [], []>} : vector<16x128xbf16>, vector<128x128xbf16>, vector<16x128xf32> -> vector<16x128xf32>
    %71 = arith.addf %3, %70 : vector<16x128xf32>
    %c0_18 = arith.constant 0 : index
    %c0_19 = arith.constant 0 : index
    %c0_20 = arith.constant 0 : index
    %72 = vector.load %arg9[%c0_18, %c0_19, %c0_20] : memref<1x1x128xf32, #tpu.memory_space<vmem>>, vector<1x1x128xf32>
    %73 = vector.shape_cast %72 : vector<1x1x128xf32> to vector<1x128xf32>
    %c0_21 = arith.constant 0 : index
    %c0_22 = arith.constant 0 : index
    %c0_23 = arith.constant 0 : index
    %74 = vector.load %arg10[%c0_21, %c0_22, %c0_23] : memref<1x1x128xf32, #tpu.memory_space<vmem>>, vector<1x1x128xf32>
    %75 = vector.shape_cast %74 : vector<1x1x128xf32> to vector<1x128xf32>
    %cst_24 = arith.constant dense<0.000000e+00> : vector<16xf32>
    %76 = vector.multi_reduction <add>, %71, %cst_24 [1] : vector<16x128xf32> to vector<16xf32>
    %77 = vector.shape_cast %76 : vector<16xf32> to vector<16x1xf32>
    %cst_25 = arith.constant 1.280000e+02 : f32
    %78 = vector.broadcast %cst_25 : f32 to vector<16x1xf32>
    %79 = arith.divf %77, %78 : vector<16x1xf32>
    %80 = vector.broadcast %79 : vector<16x1xf32> to vector<16x128xf32>
    %81 = arith.subf %71, %80 : vector<16x128xf32>
    %82 = arith.mulf %81, %81 : vector<16x128xf32>
    %cst_26 = arith.constant dense<0.000000e+00> : vector<16xf32>
    %83 = vector.multi_reduction <add>, %82, %cst_26 [1] : vector<16x128xf32> to vector<16xf32>
    %84 = vector.shape_cast %83 : vector<16xf32> to vector<16x1xf32>
    %cst_27 = arith.constant 1.280000e+02 : f32
    %85 = vector.broadcast %cst_27 : f32 to vector<16x1xf32>
    %86 = arith.divf %84, %85 : vector<16x1xf32>
    %cst_28 = arith.constant 9.99999997E-7 : f32
    %87 = vector.broadcast %cst_28 : f32 to vector<16x1xf32>
    %88 = arith.addf %86, %87 : vector<16x1xf32>
    %89 = math.rsqrt %88 : vector<16x1xf32>
    %90 = vector.broadcast %89 : vector<16x1xf32> to vector<16x128xf32>
    %91 = arith.mulf %81, %90 : vector<16x128xf32>
    %92 = vector.broadcast %73 : vector<1x128xf32> to vector<16x128xf32>
    %93 = arith.mulf %91, %92 : vector<16x128xf32>
    %94 = vector.broadcast %75 : vector<1x128xf32> to vector<16x128xf32>
    %95 = arith.addf %93, %94 : vector<16x128xf32>
    %96 = arith.truncf %95 : vector<16x128xf32> to vector<16x128xbf16>
    %c0_29 = arith.constant 0 : index
    %c0_30 = arith.constant 0 : index
    %c0_31 = arith.constant 0 : index
    %97 = vector.load %arg11[%c0_29, %c0_30, %c0_31] : memref<1x128x512xbf16, #tpu.memory_space<vmem>>, vector<1x128x512xbf16>
    %98 = vector.shape_cast %97 : vector<1x128x512xbf16> to vector<128x512xbf16>
    %cst_32 = arith.constant dense<0.000000e+00> : vector<16x512xf32>
    %99 = tpu.matmul %96, %98, %cst_32 {dimension_numbers = #tpu.dot_dimension_numbers<[1], [0], [0], [1], [0, 0, 1, 1], [], []>} : vector<16x128xbf16>, vector<128x512xbf16>, vector<16x512xf32> -> vector<16x512xf32>
    %c0_33 = arith.constant 0 : index
    %c0_34 = arith.constant 0 : index
    %c0_35 = arith.constant 0 : index
    %100 = vector.load %arg12[%c0_33, %c0_34, %c0_35] : memref<1x1x512xf32, #tpu.memory_space<vmem>>, vector<1x1x512xf32>
    %101 = vector.shape_cast %100 : vector<1x1x512xf32> to vector<1x512xf32>
    %102 = vector.broadcast %101 : vector<1x512xf32> to vector<16x512xf32>
    %103 = arith.addf %99, %102 : vector<16x512xf32>
    %cst_36 = arith.constant 0.000000e+00 : f32
    %104 = vector.broadcast %cst_36 : f32 to vector<16x512xf32>
    %105 = arith.maximumf %103, %104 : vector<16x512xf32>
    %106 = arith.truncf %105 : vector<16x512xf32> to vector<16x512xbf16>
    %c0_37 = arith.constant 0 : index
    %c0_38 = arith.constant 0 : index
    %c0_39 = arith.constant 0 : index
    %107 = vector.load %arg13[%c0_37, %c0_38, %c0_39] : memref<1x512x128xbf16, #tpu.memory_space<vmem>>, vector<1x512x128xbf16>
    %108 = vector.shape_cast %107 : vector<1x512x128xbf16> to vector<512x128xbf16>
    %cst_40 = arith.constant dense<0.000000e+00> : vector<16x128xf32>
    %109 = tpu.matmul %106, %108, %cst_40 {dimension_numbers = #tpu.dot_dimension_numbers<[1], [0], [0], [1], [0, 0, 1, 1], [], []>} : vector<16x512xbf16>, vector<512x128xbf16>, vector<16x128xf32> -> vector<16x128xf32>
    %c0_41 = arith.constant 0 : index
    %c0_42 = arith.constant 0 : index
    %c0_43 = arith.constant 0 : index
    %110 = vector.load %arg14[%c0_41, %c0_42, %c0_43] : memref<1x1x128xf32, #tpu.memory_space<vmem>>, vector<1x1x128xf32>
    %111 = vector.shape_cast %110 : vector<1x1x128xf32> to vector<1x128xf32>
    %112 = vector.broadcast %111 : vector<1x128xf32> to vector<16x128xf32>
    %113 = arith.addf %109, %112 : vector<16x128xf32>
    %114 = arith.addf %95, %113 : vector<16x128xf32>
    %c0_44 = arith.constant 0 : index
    %c0_45 = arith.constant 0 : index
    %c0_46 = arith.constant 0 : index
    %115 = vector.load %arg15[%c0_44, %c0_45, %c0_46] : memref<1x1x128xf32, #tpu.memory_space<vmem>>, vector<1x1x128xf32>
    %116 = vector.shape_cast %115 : vector<1x1x128xf32> to vector<1x128xf32>
    %c0_47 = arith.constant 0 : index
    %c0_48 = arith.constant 0 : index
    %c0_49 = arith.constant 0 : index
    %117 = vector.load %arg16[%c0_47, %c0_48, %c0_49] : memref<1x1x128xf32, #tpu.memory_space<vmem>>, vector<1x1x128xf32>
    %118 = vector.shape_cast %117 : vector<1x1x128xf32> to vector<1x128xf32>
    %cst_50 = arith.constant dense<0.000000e+00> : vector<16xf32>
    %119 = vector.multi_reduction <add>, %114, %cst_50 [1] : vector<16x128xf32> to vector<16xf32>
    %120 = vector.shape_cast %119 : vector<16xf32> to vector<16x1xf32>
    %cst_51 = arith.constant 1.280000e+02 : f32
    %121 = vector.broadcast %cst_51 : f32 to vector<16x1xf32>
    %122 = arith.divf %120, %121 : vector<16x1xf32>
    %123 = vector.broadcast %122 : vector<16x1xf32> to vector<16x128xf32>
    %124 = arith.subf %114, %123 : vector<16x128xf32>
    %125 = arith.mulf %124, %124 : vector<16x128xf32>
    %cst_52 = arith.constant dense<0.000000e+00> : vector<16xf32>
    %126 = vector.multi_reduction <add>, %125, %cst_52 [1] : vector<16x128xf32> to vector<16xf32>
    %127 = vector.shape_cast %126 : vector<16xf32> to vector<16x1xf32>
    %cst_53 = arith.constant 1.280000e+02 : f32
    %128 = vector.broadcast %cst_53 : f32 to vector<16x1xf32>
    %129 = arith.divf %127, %128 : vector<16x1xf32>
    %cst_54 = arith.constant 9.99999997E-7 : f32
    %130 = vector.broadcast %cst_54 : f32 to vector<16x1xf32>
    %131 = arith.addf %129, %130 : vector<16x1xf32>
    %132 = math.rsqrt %131 : vector<16x1xf32>
    %133 = vector.broadcast %132 : vector<16x1xf32> to vector<16x128xf32>
    %134 = arith.mulf %124, %133 : vector<16x128xf32>
    %135 = vector.broadcast %116 : vector<1x128xf32> to vector<16x128xf32>
    %136 = arith.mulf %134, %135 : vector<16x128xf32>
    %137 = vector.broadcast %118 : vector<1x128xf32> to vector<16x128xf32>
    %138 = arith.addf %136, %137 : vector<16x128xf32>
    %c0_55 = arith.constant 0 : index
    %c0_56 = arith.constant 0 : index
    %139 = vector.load %arg18[%c0_55, %c0_56] : memref<16x128xf32, #tpu.memory_space<vmem>>, vector<16x128xf32>
    tpu.vector_store %arg18[%c0_55, %c0_56], %138 {strides = array<i32>} : memref<16x128xf32, #tpu.memory_space<vmem>>, vector<16x128xf32>,
    %c1_i32 = arith.constant 1 : i32
    %140 = arith.cmpi eq, %arg1, %c1_i32 : i32
    %141 = arith.extui %140 : i1 to i32
    %c0_i32_57 = arith.constant 0 : i32
    %142 = arith.cmpi ne, %141, %c0_i32_57 : i32
    scf.if %142 {
      %c0_58 = arith.constant 0 : index
      %c0_59 = arith.constant 0 : index
      %c0_60 = arith.constant 0 : index
      %143 = vector.load %arg17[%c0_58, %c0_59, %c0_60] : memref<1x16x128xf32, #tpu.memory_space<vmem>>, vector<1x16x128xf32>
      %144 = vector.shape_cast %143 : vector<1x16x128xf32> to vector<16x128xf32>
      %145 = vector.shape_cast %138 : vector<16x128xf32> to vector<1x16x128xf32>
      tpu.vector_store %arg17[%c0_58, %c0_59, %c0_60], %145 {strides = array<i32>} : memref<1x16x128xf32, #tpu.memory_space<vmem>>, vector<1x16x128xf32>,
    } else {
    }
    return
  }
  func.func @transform_0(%arg0: i32, %arg1: i32) -> (i32, i32, i32) {
    %c0_i32 = arith.constant 0 : i32
    %c0_i32_0 = arith.constant 0 : i32
    %c0_i32_1 = arith.constant 0 : i32
    return %arg0, %c0_i32, %c0_i32_0 : i32, i32, i32
  }
  func.func @transform_1(%arg0: i32, %arg1: i32) -> (i32, i32) {
    %c0_i32 = arith.constant 0 : i32
    %c0_i32_0 = arith.constant 0 : i32
    %c0_i32_1 = arith.constant 0 : i32
    return %c0_i32, %c0_i32_0 : i32, i32
  }
  func.func @transform_2(%arg0: i32, %arg1: i32) -> (i32, i32) {
    %c0_i32 = arith.constant 0 : i32
    %c0_i32_0 = arith.constant 0 : i32
    %c0_i32_1 = arith.constant 0 : i32
    return %c0_i32, %c0_i32_0 : i32, i32
  }
  func.func @transform_3(%arg0: i32, %arg1: i32) -> (i32, i32) {
    %c0_i32 = arith.constant 0 : i32
    %c0_i32_0 = arith.constant 0 : i32
    %c0_i32_1 = arith.constant 0 : i32
    return %c0_i32, %c0_i32_0 : i32, i32
  }
  func.func @transform_4(%arg0: i32, %arg1: i32) -> (i32, i32, i32, i32) {
    %c0_i32 = arith.constant 0 : i32
    %c0_i32_0 = arith.constant 0 : i32
    %c0_i32_1 = arith.constant 0 : i32
    %c0_i32_2 = arith.constant 0 : i32
    return %arg0, %c0_i32, %c0_i32_0, %c0_i32_1 : i32, i32, i32, i32
  }
  func.func @transform_5(%arg0: i32, %arg1: i32) -> (i32, i32, i32) {
    %c0_i32 = arith.constant 0 : i32
    %c0_i32_0 = arith.constant 0 : i32
    %c0_i32_1 = arith.constant 0 : i32
    return %arg1, %c0_i32, %c0_i32_0 : i32, i32, i32
  }
  func.func @transform_6(%arg0: i32, %arg1: i32) -> (i32, i32, i32) {
    %c0_i32 = arith.constant 0 : i32
    %c0_i32_0 = arith.constant 0 : i32
    %c0_i32_1 = arith.constant 0 : i32
    return %arg1, %c0_i32, %c0_i32_0 : i32, i32, i32
  }
  func.func @transform_7(%arg0: i32, %arg1: i32) -> (i32, i32, i32) {
    %c0_i32 = arith.constant 0 : i32
    %c0_i32_0 = arith.constant 0 : i32
    %c0_i32_1 = arith.constant 0 : i32
    return %arg1, %c0_i32, %c0_i32_0 : i32, i32, i32
  }
  func.func @transform_8(%arg0: i32, %arg1: i32) -> (i32, i32, i32) {
    %c0_i32 = arith.constant 0 : i32
    %c0_i32_0 = arith.constant 0 : i32
    %c0_i32_1 = arith.constant 0 : i32
    return %arg1, %c0_i32, %c0_i32_0 : i32, i32, i32
  }
  func.func @transform_9(%arg0: i32, %arg1: i32) -> (i32, i32, i32) {
    %c0_i32 = arith.constant 0 : i32
    %c0_i32_0 = arith.constant 0 : i32
    %c0_i32_1 = arith.constant 0 : i32
    return %arg1, %c0_i32, %c0_i32_0 : i32, i32, i32
  }
  func.func @transform_10(%arg0: i32, %arg1: i32) -> (i32, i32, i32) {
    %c0_i32 = arith.constant 0 : i32
    %c0_i32_0 = arith.constant 0 : i32
    %c0_i32_1 = arith.constant 0 : i32
    return %arg1, %c0_i32, %c0_i32_0 : i32, i32, i32
  }
  func.func @transform_11(%arg0: i32, %arg1: i32) -> (i32, i32, i32) {
    %c0_i32 = arith.constant 0 : i32
    %c0_i32_0 = arith.constant 0 : i32
    %c0_i32_1 = arith.constant 0 : i32
    return %arg1, %c0_i32, %c0_i32_0 : i32, i32, i32
  }
  func.func @transform_12(%arg0: i32, %arg1: i32) -> (i32, i32, i32) {
    %c0_i32 = arith.constant 0 : i32
    %c0_i32_0 = arith.constant 0 : i32
    %c0_i32_1 = arith.constant 0 : i32
    return %arg1, %c0_i32, %c0_i32_0 : i32, i32, i32
  }
  func.func @transform_13(%arg0: i32, %arg1: i32) -> (i32, i32, i32) {
    %c0_i32 = arith.constant 0 : i32
    %c0_i32_0 = arith.constant 0 : i32
    %c0_i32_1 = arith.constant 0 : i32
    return %arg1, %c0_i32, %c0_i32_0 : i32, i32, i32
  }
  func.func @transform_14(%arg0: i32, %arg1: i32) -> (i32, i32, i32) {
    %c0_i32 = arith.constant 0 : i32
    %c0_i32_0 = arith.constant 0 : i32
    %c0_i32_1 = arith.constant 0 : i32
    return %arg1, %c0_i32, %c0_i32_0 : i32, i32, i32
  }
  func.func @transform_15(%arg0: i32, %arg1: i32) -> (i32, i32, i32) {
    %c0_i32 = arith.constant 0 : i32
    %c0_i32_0 = arith.constant 0 : i32
    %c0_i32_1 = arith.constant 0 : i32
    return %arg0, %c0_i32, %c0_i32_0 : i32, i32, i32
  }
}

</mosaic_0001>

<llo_original>
// kernel: tpu_custom_call.1
$region0: #{tpu_custom_call.1}
  #allocation0 [shape = 'u32[]', space=smem, size = 0x4, offset = 0x4, fixed_abs, tag = 'smem constant byte address 0x4 - core index']
  #allocation1 [shape = 'u32[144,128]{1,0:T(1,128)}', space=vmem, size = 0x12000, scoped, tag = 'internal scratch']
  #allocation2 [shape = 'f32[16,128]{1,0:T(8,128)}', space=vmem, size = 0x2000, scoped, tag = 'scratch operand']
  %s0 = inlined_call_operand.hbm [shape: f32[2,16,128], index: 0, kind: input, shape index: {}]
  %s1 = inlined_call_operand.hbm [shape: f32[16,128], index: 1, kind: input, shape index: {}]
  %s2 = inlined_call_operand.hbm [shape: f32[1,128], index: 2, kind: input, shape index: {}]
  %s3 = inlined_call_operand.hbm [shape: f32[1,128], index: 3, kind: input, shape index: {}]
  %s4 = inlined_call_operand.hbm [shape: f32[2,1,16,16], index: 4, kind: input, shape index: {}]
  %s5 = inlined_call_operand.hbm [shape: bf16[2,128,384], index: 5, kind: input, shape index: {}]
  %s6 = inlined_call_operand.hbm [shape: bf16[2,128,128], index: 6, kind: input, shape index: {}]
  %s7 = inlined_call_operand.vmem [shape: f32[2,1,128], index: 7, kind: input, shape index: {}]
  %s8 = inlined_call_operand.vmem [shape: f32[2,1,128], index: 8, kind: input, shape index: {}]
  %s9 = inlined_call_operand.hbm [shape: bf16[2,128,512], index: 9, kind: input, shape index: {}]
  %s10 = inlined_call_operand.vmem [shape: f32[2,1,512], index: 10, kind: input, shape index: {}]
  %s11 = inlined_call_operand.hbm [shape: bf16[2,512,128], index: 11, kind: input, shape index: {}]
  %s12 = inlined_call_operand.vmem [shape: f32[2,1,128], index: 12, kind: input, shape index: {}]
  %s13 = inlined_call_operand.vmem [shape: f32[2,1,128], index: 13, kind: input, shape index: {}]
  %s14 = inlined_call_operand.vmem [shape: f32[2,1,128], index: 14, kind: input, shape index: {}]
  %s15 = inlined_call_operand.hbm [shape: f32[2,16,128], index: 15, kind: output, shape index: {}]
  %s16 = sld [smem:[#allocation0]]
  $region137: #{tpu_custom_call.1} parent=0
    _
  %s18 = ssub.s32 1, %s16
  %s19 = scalar_select 0, %s18, %s16
  $region1: #{tpu_custom_call.1} parent=0
    #allocation3 [shape = 'u8[16384]{0}', space=vmem, size = 0x4000, scoped, tag = 'input window, operand 0']
    #allocation4 [shape = 's32[2]{0}', space=sflag, size = 0x8, scoped, tag = 'scoped memory for tpu_custom_call.1']
    #allocation5 [shape = 's32[2]{0}', space=sflag, size = 0x8, scoped, tag = 'scoped memory for tpu_custom_call.1']
    #allocation6 [shape = 'u8[8192]{0}', space=vmem, size = 0x2000, scoped, tag = 'input window, operand 1, single buffered']
    #allocation7 [shape = 's32[1]{0}', space=sflag, size = 0x4, scoped, tag = 'scoped memory for tpu_custom_call.1']
    #allocation8 [shape = 'u8[512]{0}', space=vmem, size = 0x400, scoped, tag = 'input window, operand 2, single buffered']
    #allocation9 [shape = 'u8[512]{0}', space=vmem, size = 0x400, scoped, tag = 'input window, operand 3, single buffered']
    #allocation10 [shape = 's32[1]{0}', space=sflag, size = 0x4, scoped, tag = 'scoped memory for tpu_custom_call.1']
    #allocation11 [shape = 'u8[16384]{0}', space=vmem, size = 0x4000, scoped, tag = 'input window, operand 4']
    #allocation12 [shape = 'u8[196608]{0}', space=vmem, size = 0x30000, scoped, tag = 'input window, operand 5']
    #allocation13 [shape = 'u8[65536]{0}', space=vmem, size = 0x10000, scoped, tag = 'input window, operand 6']
    #allocation14 [shape = 'u8[262144]{0}', space=vmem, size = 0x40000, scoped, tag = 'input window, operand 9']
    #allocation15 [shape = 'u8[262144]{0}', space=vmem, size = 0x40000, scoped, tag = 'input window, operand 11']
    #allocation16 [shape = 'u8[16384]{0}', space=vmem, size = 0x4000, scoped, tag = 'output window, operand 0']
    %20 = vsyncpa [#allocation4], 0
    %s21 = scalar_lea.sflag [#allocation4], 1
    %22 = vsyncpa %s21, 0
    %23 = vsyncpa [#allocation7], 0
    %24 = vsyncpa [#allocation10], 0
    %25 = vsyncpa [#allocation5], 0
    %s26 = scalar_lea.sflag [#allocation5], 1
    %27 = vsyncpa %s26, 0
    loop: start=0, step=1, limit=6
    $region2: #{tpu_custom_call.1} parent=1 // loop_pre_header
      _
    $region3: #{tpu_custom_call.1} parent=1 // loop_header
      %s29 = sphi 0, %s33
      %p30 = scmp.ge.s32.totalorder %s29, 6
      %s36 = sphi 0, %s48
      %s37 = sphi 0, %s44
      %s38 = sphi 0, %s36
      %s39 = sphi 0, %s37
      %s40 = sphi 0, %s38
      %s41 = sphi 0, %s39
      %s51 = sphi 0, %s53
      %s54 = sphi 0, %s51
      %s55 = sphi 0, %s54
      %s71 = sphi 0, %s55
      %s75 = sphi 0, %s75
      %s77 = sphi 0, %s75
      %s78 = sphi 0, %s77
      %s92 = sphi 0, %s78
      %s96 = sphi 0, %s96
      %s98 = sphi 0, %s96
      %s99 = sphi 0, %s98
      %s113 = sphi 0, %s99
      %s117 = sphi 0, %s117
      %s119 = sphi 0, %s117
      %s120 = sphi 0, %s119
      %s134 = sphi 0, %s120
      %s140 = sphi 0, %s142
      %s143 = sphi 0, %s140
      %s144 = sphi 0, %s143
      %s160 = sphi 0, %s144
      %s166 = sphi 0, %s168
      %s169 = sphi 0, %s166
      %s170 = sphi 0, %s169
      %s186 = sphi 0, %s170
      %s192 = sphi 0, %s194
      %s195 = sphi 0, %s192
      %s196 = sphi 0, %s195
      %s212 = sphi 0, %s196
      %s218 = sphi 0, %s220
      %s221 = sphi 0, %s218
      %s222 = sphi 0, %s221
      %s238 = sphi 0, %s222
      %s244 = sphi 0, %s246
      %s247 = sphi 0, %s244
      %s248 = sphi 0, %s247
      %s264 = sphi 0, %s248
      %s270 = sphi 0, %s272
      %s273 = sphi 0, %s270
      %s274 = sphi 0, %s273
      %s290 = sphi 0, %s274
      %s296 = sphi 0, %s298
      %s299 = sphi 0, %s296
      %s300 = sphi 0, %s299
      %s316 = sphi 0, %s300
      %s322 = sphi 0, %s324
      %s325 = sphi 0, %s322
      %s326 = sphi 0, %s325
      %s342 = sphi 0, %s326
      %s348 = sphi 0, %s350
      %s351 = sphi 0, %s348
      %s352 = sphi 0, %s351
      %s368 = sphi 0, %s352
      %s374 = sphi 0, %s376
      %s377 = sphi 0, %s374
      %s378 = sphi 0, %s377
      %s394 = sphi 0, %s378
      %s400 = sphi 0, %s402
      %s403 = sphi 0, %s400
      %s404 = sphi 0, %s403
      %s420 = sphi 0, %s404
      %s426 = sphi 0, %s428
      %s429 = sphi 0, %s426
      %s430 = sphi 0, %s429
      %s446 = sphi 0, %s430
    $region4: #{tpu_custom_call.1} parent=1 // loop_header_branch
      %32 = sbr.rel (%p30) target = $region8
    $region5: #{tpu_custom_call.1} parent=1 // loop_body
      %s34 = ssub.s32 %s29, 1
      %s35 = ssub.s32 %s29, 2
      %s42 = sadd.s32 1, %s37
      %p43 = scmp.ge.s32.totalorder %s42, 2
      %s44 = scalar_select %p43, 0, %s42
      %s45 = sadd.s32 1, %s36
      %s46 = scalar_select %p43, %s45, %s36
      %p47 = scmp.ge.s32.totalorder %s46, 2
      %s48 = scalar_select %p47, 0, %s46
      %s49 = ssub.s32 %s36, %s48
      %p50 = scmp.eq.s32.totalorder %s49, 0
      %s52 = sadd.s32 %s51, 1
      %s53 = scalar_select %p50, %s51, %s52
      %p56 = pneg %p50
      %p57 = scmp.eq.s32.totalorder %s29, 3
      %p58 = por %p56, %p57
      %p59 = scmp.ne.s32.totalorder %s51, %s54
      %p60 = scmp.eq.s32.totalorder %s29, 0
      %p61 = por %p59, %p60
      %p62 = scmp.ne.s32.totalorder %s51, %s54
      %p63 = scmp.eq.s32.totalorder %s34, 3
      %p64 = por %p62, %p63
      %p65 = scmp.ne.s32.totalorder %s54, %s55
      %p66 = scmp.eq.s32.totalorder %s34, 0
      %p67 = por %p65, %p66
      %p68 = scmp.ne.s32.totalorder %s54, %s55
      %p69 = scmp.eq.s32.totalorder %s35, 3
      %p70 = por %p68, %p69
      %p72 = scmp.ne.s32.totalorder %s55, %s71
      %p73 = scmp.eq.s32.totalorder %s35, 0
      %p74 = por %p72, %p73
      %s76 = sadd.s32 %s75, 1
      %p79 = scmp.eq.s32.totalorder %s29, 3
      %p80 = scmp.ne.s32.totalorder %s75, %s77
      %p81 = scmp.eq.s32.totalorder %s29, 0
      %p82 = por %p80, %p81
      %p83 = scmp.ne.s32.totalorder %s75, %s77
      %p84 = scmp.eq.s32.totalorder %s34, 3
      %p85 = por %p83, %p84
      %p86 = scmp.ne.s32.totalorder %s77, %s78
      %p87 = scmp.eq.s32.totalorder %s34, 0
      %p88 = por %p86, %p87
      %p89 = scmp.ne.s32.totalorder %s77, %s78
      %p90 = scmp.eq.s32.totalorder %s35, 3
      %p91 = por %p89, %p90
      %p93 = scmp.ne.s32.totalorder %s78, %s92
      %p94 = scmp.eq.s32.totalorder %s35, 0
      %p95 = por %p93, %p94
      %s97 = sadd.s32 %s96, 1
      %p100 = scmp.eq.s32.totalorder %s29, 3
      %p101 = scmp.ne.s32.totalorder %s96, %s98
      %p102 = scmp.eq.s32.totalorder %s29, 0
      %p103 = por %p101, %p102
      %p104 = scmp.ne.s32.totalorder %s96, %s98
      %p105 = scmp.eq.s32.totalorder %s34, 3
      %p106 = por %p104, %p105
      %p107 = scmp.ne.s32.totalorder %s98, %s99
      %p108 = scmp.eq.s32.totalorder %s34, 0
      %p109 = por %p107, %p108
      %p110 = scmp.ne.s32.totalorder %s98, %s99
      %p111 = scmp.eq.s32.totalorder %s35, 3
      %p112 = por %p110, %p111
      %p114 = scmp.ne.s32.totalorder %s99, %s113
      %p115 = scmp.eq.s32.totalorder %s35, 0
      %p116 = por %p114, %p115
      %s118 = sadd.s32 %s117, 1
      %p121 = scmp.eq.s32.totalorder %s29, 3
      %p122 = scmp.ne.s32.totalorder %s117, %s119
      %p123 = scmp.eq.s32.totalorder %s29, 0
      %p124 = por %p122, %p123
      %p125 = scmp.ne.s32.totalorder %s117, %s119
      %p126 = scmp.eq.s32.totalorder %s34, 3
      %p127 = por %p125, %p126
      %p128 = scmp.ne.s32.totalorder %s119, %s120
      %p129 = scmp.eq.s32.totalorder %s34, 0
      %p130 = por %p128, %p129
      %p131 = scmp.ne.s32.totalorder %s119, %s120
      %p132 = scmp.eq.s32.totalorder %s35, 3
      %p133 = por %p131, %p132
      %p135 = scmp.ne.s32.totalorder %s120, %s134
      %p136 = scmp.eq.s32.totalorder %s35, 0
      %p137 = por %p135, %p136
      %s138 = ssub.s32 %s36, %s48
      %p139 = scmp.eq.s32.totalorder %s138, 0
      %s141 = sadd.s32 %s140, 1
      %s142 = scalar_select %p139, %s140, %s141
      %p145 = pneg %p139
      %p146 = scmp.eq.s32.totalorder %s29, 3
      %p147 = por %p145, %p146
      %p148 = scmp.ne.s32.totalorder %s140, %s143
      %p149 = scmp.eq.s32.totalorder %s29, 0
      %p150 = por %p148, %p149
      %p151 = scmp.ne.s32.totalorder %s140, %s143
      %p152 = scmp.eq.s32.totalorder %s34, 3
      %p153 = por %p151, %p152
      %p154 = scmp.ne.s32.totalorder %s143, %s144
      %p155 = scmp.eq.s32.totalorder %s34, 0
      %p156 = por %p154, %p155
      %p157 = scmp.ne.s32.totalorder %s143, %s144
      %p158 = scmp.eq.s32.totalorder %s35, 3
      %p159 = por %p157, %p158
      %p161 = scmp.ne.s32.totalorder %s144, %s160
      %p162 = scmp.eq.s32.totalorder %s35, 0
      %p163 = por %p161, %p162
      %s164 = ssub.s32 %s37, %s44
      %p165 = scmp.eq.s32.totalorder %s164, 0
      %s167 = sadd.s32 %s166, 1
      %s168 = scalar_select %p165, %s166, %s167
      %p171 = pneg %p165
      %p172 = scmp.eq.s32.totalorder %s29, 3
      %p173 = por %p171, %p172
      %p174 = scmp.ne.s32.totalorder %s166, %s169
      %p175 = scmp.eq.s32.totalorder %s29, 0
      %p176 = por %p174, %p175
      %p177 = scmp.ne.s32.totalorder %s166, %s169
      %p178 = scmp.eq.s32.totalorder %s34, 3
      %p179 = por %p177, %p178
      %p180 = scmp.ne.s32.totalorder %s169, %s170
      %p181 = scmp.eq.s32.totalorder %s34, 0
      %p182 = por %p180, %p181
      %p183 = scmp.ne.s32.totalorder %s169, %s170
      %p184 = scmp.eq.s32.totalorder %s35, 3
      %p185 = por %p183, %p184
      %p187 = scmp.ne.s32.totalorder %s170, %s186
      %p188 = scmp.eq.s32.totalorder %s35, 0
      %p189 = por %p187, %p188
      %s190 = ssub.s32 %s37, %s44
      %p191 = scmp.eq.s32.totalorder %s190, 0
      %s193 = sadd.s32 %s192, 1
      %s194 = scalar_select %p191, %s192, %s193
      %p197 = pneg %p191
      %p198 = scmp.eq.s32.totalorder %s29, 3
      %p199 = por %p197, %p198
      %p200 = scmp.ne.s32.totalorder %s192, %s195
      %p201 = scmp.eq.s32.totalorder %s29, 0
      %p202 = por %p200, %p201
      %p203 = scmp.ne.s32.totalorder %s192, %s195
      %p204 = scmp.eq.s32.totalorder %s34, 3
      %p205 = por %p203, %p204
      %p206 = scmp.ne.s32.totalorder %s195, %s196
      %p207 = scmp.eq.s32.totalorder %s34, 0
      %p208 = por %p206, %p207
      %p209 = scmp.ne.s32.totalorder %s195, %s196
      %p210 = scmp.eq.s32.totalorder %s35, 3
      %p211 = por %p209, %p210
      %p213 = scmp.ne.s32.totalorder %s196, %s212
      %p214 = scmp.eq.s32.totalorder %s35, 0
      %p215 = por %p213, %p214
      %s216 = ssub.s32 %s37, %s44
      %p217 = scmp.eq.s32.totalorder %s216, 0
      %s219 = sadd.s32 %s218, 1
      %s220 = scalar_select %p217, %s218, %s219
      %p223 = pneg %p217
      %p224 = scmp.eq.s32.totalorder %s29, 3
      %p225 = por %p223, %p224
      %p226 = scmp.ne.s32.totalorder %s218, %s221
      %p227 = scmp.eq.s32.totalorder %s29, 0
      %p228 = por %p226, %p227
      %p229 = scmp.ne.s32.totalorder %s218, %s221
      %p230 = scmp.eq.s32.totalorder %s34, 3
      %p231 = por %p229, %p230
      %p232 = scmp.ne.s32.totalorder %s221, %s222
      %p233 = scmp.eq.s32.totalorder %s34, 0
      %p234 = por %p232, %p233
      %p235 = scmp.ne.s32.totalorder %s221, %s222
      %p236 = scmp.eq.s32.totalorder %s35, 3
      %p237 = por %p235, %p236
      %p239 = scmp.ne.s32.totalorder %s222, %s238
      %p240 = scmp.eq.s32.totalorder %s35, 0
      %p241 = por %p239, %p240
      %s242 = ssub.s32 %s37, %s44
      %p243 = scmp.eq.s32.totalorder %s242, 0
      %s245 = sadd.s32 %s244, 1
      %s246 = scalar_select %p243, %s244, %s245
      %p249 = pneg %p243
      %p250 = scmp.eq.s32.totalorder %s29, 3
      %p251 = por %p249, %p250
      %p252 = scmp.ne.s32.totalorder %s244, %s247
      %p253 = scmp.eq.s32.totalorder %s29, 0
      %p254 = por %p252, %p253
      %p255 = scmp.ne.s32.totalorder %s244, %s247
      %p256 = scmp.eq.s32.totalorder %s34, 3
      %p257 = por %p255, %p256
      %p258 = scmp.ne.s32.totalorder %s247, %s248
      %p259 = scmp.eq.s32.totalorder %s34, 0
      %p260 = por %p258, %p259
      %p261 = scmp.ne.s32.totalorder %s247, %s248
      %p262 = scmp.eq.s32.totalorder %s35, 3
      %p263 = por %p261, %p262
      %p265 = scmp.ne.s32.totalorder %s248, %s264
      %p266 = scmp.eq.s32.totalorder %s35, 0
      %p267 = por %p265, %p266
      %s268 = ssub.s32 %s37, %s44
      %p269 = scmp.eq.s32.totalorder %s268, 0
      %s271 = sadd.s32 %s270, 1
      %s272 = scalar_select %p269, %s270, %s271
      %p275 = pneg %p269
      %p276 = scmp.eq.s32.totalorder %s29, 3
      %p277 = por %p275, %p276
      %p278 = scmp.ne.s32.totalorder %s270, %s273
      %p279 = scmp.eq.s32.totalorder %s29, 0
      %p280 = por %p278, %p279
      %p281 = scmp.ne.s32.totalorder %s270, %s273
      %p282 = scmp.eq.s32.totalorder %s34, 3
      %p283 = por %p281, %p282
      %p284 = scmp.ne.s32.totalorder %s273, %s274
      %p285 = scmp.eq.s32.totalorder %s34, 0
      %p286 = por %p284, %p285
      %p287 = scmp.ne.s32.totalorder %s273, %s274
      %p288 = scmp.eq.s32.totalorder %s35, 3
      %p289 = por %p287, %p288
      %p291 = scmp.ne.s32.totalorder %s274, %s290
      %p292 = scmp.eq.s32.totalorder %s35, 0
      %p293 = por %p291, %p292
      %s294 = ssub.s32 %s37, %s44
      %p295 = scmp.eq.s32.totalorder %s294, 0
      %s297 = sadd.s32 %s296, 1
      %s298 = scalar_select %p295, %s296, %s297
      %p301 = pneg %p295
      %p302 = scmp.eq.s32.totalorder %s29, 3
      %p303 = por %p301, %p302
      %p304 = scmp.ne.s32.totalorder %s296, %s299
      %p305 = scmp.eq.s32.totalorder %s29, 0
      %p306 = por %p304, %p305
      %p307 = scmp.ne.s32.totalorder %s296, %s299
      %p308 = scmp.eq.s32.totalorder %s34, 3
      %p309 = por %p307, %p308
      %p310 = scmp.ne.s32.totalorder %s299, %s300
      %p311 = scmp.eq.s32.totalorder %s34, 0
      %p312 = por %p310, %p311
      %p313 = scmp.ne.s32.totalorder %s299, %s300
      %p314 = scmp.eq.s32.totalorder %s35, 3
      %p315 = por %p313, %p314
      %p317 = scmp.ne.s32.totalorder %s300, %s316
      %p318 = scmp.eq.s32.totalorder %s35, 0
      %p319 = por %p317, %p318
      %s320 = ssub.s32 %s37, %s44
      %p321 = scmp.eq.s32.totalorder %s320, 0
      %s323 = sadd.s32 %s322, 1
      %s324 = scalar_select %p321, %s322, %s323
      %p327 = pneg %p321
      %p328 = scmp.eq.s32.totalorder %s29, 3
      %p329 = por %p327, %p328
      %p330 = scmp.ne.s32.totalorder %s322, %s325
      %p331 = scmp.eq.s32.totalorder %s29, 0
      %p332 = por %p330, %p331
      %p333 = scmp.ne.s32.totalorder %s322, %s325
      %p334 = scmp.eq.s32.totalorder %s34, 3
      %p335 = por %p333, %p334
      %p336 = scmp.ne.s32.totalorder %s325, %s326
      %p337 = scmp.eq.s32.totalorder %s34, 0
      %p338 = por %p336, %p337
      %p339 = scmp.ne.s32.totalorder %s325, %s326
      %p340 = scmp.eq.s32.totalorder %s35, 3
      %p341 = por %p339, %p340
      %p343 = scmp.ne.s32.totalorder %s326, %s342
      %p344 = scmp.eq.s32.totalorder %s35, 0
      %p345 = por %p343, %p344
      %s346 = ssub.s32 %s37, %s44
      %p347 = scmp.eq.s32.totalorder %s346, 0
      %s349 = sadd.s32 %s348, 1
      %s350 = scalar_select %p347, %s348, %s349
      %p353 = pneg %p347
      %p354 = scmp.eq.s32.totalorder %s29, 3
      %p355 = por %p353, %p354
      %p356 = scmp.ne.s32.totalorder %s348, %s351
      %p357 = scmp.eq.s32.totalorder %s29, 0
      %p358 = por %p356, %p357
      %p359 = scmp.ne.s32.totalorder %s348, %s351
      %p360 = scmp.eq.s32.totalorder %s34, 3
      %p361 = por %p359, %p360
      %p362 = scmp.ne.s32.totalorder %s351, %s352
      %p363 = scmp.eq.s32.totalorder %s34, 0
      %p364 = por %p362, %p363
      %p365 = scmp.ne.s32.totalorder %s351, %s352
      %p366 = scmp.eq.s32.totalorder %s35, 3
      %p367 = por %p365, %p366
      %p369 = scmp.ne.s32.totalorder %s352, %s368
      %p370 = scmp.eq.s32.totalorder %s35, 0
      %p371 = por %p369, %p370
      %s372 = ssub.s32 %s37, %s44
      %p373 = scmp.eq.s32.totalorder %s372, 0
      %s375 = sadd.s32 %s374, 1
      %s376 = scalar_select %p373, %s374, %s375
      %p379 = pneg %p373
      %p380 = scmp.eq.s32.totalorder %s29, 3
      %p381 = por %p379, %p380
      %p382 = scmp.ne.s32.totalorder %s374, %s377
      %p383 = scmp.eq.s32.totalorder %s29, 0
      %p384 = por %p382, %p383
      %p385 = scmp.ne.s32.totalorder %s374, %s377
      %p386 = scmp.eq.s32.totalorder %s34, 3
      %p387 = por %p385, %p386
      %p388 = scmp.ne.s32.totalorder %s377, %s378
      %p389 = scmp.eq.s32.totalorder %s34, 0
      %p390 = por %p388, %p389
      %p391 = scmp.ne.s32.totalorder %s377, %s378
      %p392 = scmp.eq.s32.totalorder %s35, 3
      %p393 = por %p391, %p392
      %p395 = scmp.ne.s32.totalorder %s378, %s394
      %p396 = scmp.eq.s32.totalorder %s35, 0
      %p397 = por %p395, %p396
      %s398 = ssub.s32 %s37, %s44
      %p399 = scmp.eq.s32.totalorder %s398, 0
      %s401 = sadd.s32 %s400, 1
      %s402 = scalar_select %p399, %s400, %s401
      %p405 = pneg %p399
      %p406 = scmp.eq.s32.totalorder %s29, 3
      %p407 = por %p405, %p406
      %p408 = scmp.ne.s32.totalorder %s400, %s403
      %p409 = scmp.eq.s32.totalorder %s29, 0
      %p410 = por %p408, %p409
      %p411 = scmp.ne.s32.totalorder %s400, %s403
      %p412 = scmp.eq.s32.totalorder %s34, 3
      %p413 = por %p411, %p412
      %p414 = scmp.ne.s32.totalorder %s403, %s404
      %p415 = scmp.eq.s32.totalorder %s34, 0
      %p416 = por %p414, %p415
      %p417 = scmp.ne.s32.totalorder %s403, %s404
      %p418 = scmp.eq.s32.totalorder %s35, 3
      %p419 = por %p417, %p418
      %p421 = scmp.ne.s32.totalorder %s404, %s420
      %p422 = scmp.eq.s32.totalorder %s35, 0
      %p423 = por %p421, %p422
      %s424 = ssub.s32 %s36, %s48
      %p425 = scmp.eq.s32.totalorder %s424, 0
      %s427 = sadd.s32 %s426, 1
      %s428 = scalar_select %p425, %s426, %s427
      %p431 = pneg %p425
      %p432 = scmp.eq.s32.totalorder %s29, 3
      %p433 = por %p431, %p432
      %p434 = scmp.ne.s32.totalorder %s426, %s429
      %p435 = scmp.eq.s32.totalorder %s29, 0
      %p436 = por %p434, %p435
      %p437 = scmp.ne.s32.totalorder %s426, %s429
      %p438 = scmp.eq.s32.totalorder %s34, 3
      %p439 = por %p437, %p438
      %p440 = scmp.ne.s32.totalorder %s429, %s430
      %p441 = scmp.eq.s32.totalorder %s34, 0
      %p442 = por %p440, %p441
      %p443 = scmp.ne.s32.totalorder %s429, %s430
      %p444 = scmp.eq.s32.totalorder %s35, 3
      %p445 = por %p443, %p444
      %p447 = scmp.ne.s32.totalorder %s430, %s446
      %p448 = scmp.eq.s32.totalorder %s35, 0
      %p449 = por %p447, %p448
      %p450 = scmp.le.s32.totalorder 1, %s29
      %p451 = scmp.lt.s32.totalorder %s29, 5
      %p452 = pnand %p450, %p451
      %p453 = pneg %p452
      // Predicated region
      $region9: #{tpu_custom_call.1} parent=5 // pred_check
        _
      $region10: #{tpu_custom_call.1} parent=5 // pred_check_branch
        %455 = sbr.rel (%p452) target = $region12
      $region11: #{tpu_custom_call.1} parent=5 // pred_region
        %s456 = ssub.s32 %s29, 1
        // Predicated region
        $region13: #{tpu_custom_call.1} parent=11 // pred_check
          %p457 = pneg %p88
        $region14: #{tpu_custom_call.1} parent=11 // pred_check_branch
          %459 = sbr.rel (%p457) target = $region16
        $region15: #{tpu_custom_call.1} parent=11 // pred_region
          %s461 = ssub.s32 256, 256
          %462 = vsyncadd [#allocation7], %s461
          %s463 = sshll.u32 [#allocation6], 4
          %s464 = int_to_ptr.vmem [resolvable:$true] %s463
          %469 = dma.hbm_to_vmem [thread:$0]  %s1, 256, %s464, [#allocation7], 128, 128, 8
        $region16: #{tpu_custom_call.1} parent=11 // pred_fallthru
          _
        // Predicated region
        $region17: #{tpu_custom_call.1} parent=11 // pred_check
          %p470 = pneg %p109
        $region18: #{tpu_custom_call.1} parent=11 // pred_check_branch
          %472 = sbr.rel (%p470) target = $region20
        $region19: #{tpu_custom_call.1} parent=11 // pred_region
          %s474 = ssub.s32 16, 16
          %475 = vsyncadd [#allocation7], %s474
          %s477 = sshll.u32 [#allocation8], 4
          %s478 = int_to_ptr.vmem [resolvable:$true] %s477
          %480 = dma.hbm_to_vmem [thread:$0]  %s2, 16, %s478, [#allocation7]
        $region20: #{tpu_custom_call.1} parent=11 // pred_fallthru
          _
        // Predicated region
        $region21: #{tpu_custom_call.1} parent=11 // pred_check
          %p481 = pneg %p130
        $region22: #{tpu_custom_call.1} parent=11 // pred_check_branch
          %483 = sbr.rel (%p481) target = $region24
        $region23: #{tpu_custom_call.1} parent=11 // pred_region
          %s485 = ssub.s32 16, 16
          %486 = vsyncadd [#allocation10], %s485
          %s488 = sshll.u32 [#allocation9], 4
          %s489 = int_to_ptr.vmem [resolvable:$true] %s488
          %491 = dma.hbm_to_vmem [thread:$0]  %s3, 16, %s489, [#allocation10]
        $region24: #{tpu_custom_call.1} parent=11 // pred_fallthru
          _
      $region12: #{tpu_custom_call.1} parent=5 // pred_fallthru
        _
      %p492 = scmp.lt.s32.totalorder %s29, 4
      // Predicated region
      $region25: #{tpu_custom_call.1} parent=5 // pred_check
        %p493 = pneg %p492
      $region26: #{tpu_custom_call.1} parent=5 // pred_check_branch
        %495 = sbr.rel (%p493) target = $region28
      $region27: #{tpu_custom_call.1} parent=5 // pred_region
        // Predicated region
        $region29: #{tpu_custom_call.1} parent=27 // pred_check
          %p496 = pneg %p61
        $region30: #{tpu_custom_call.1} parent=27 // pred_check_branch
          %498 = sbr.rel (%p496) target = $region32
        $region31: #{tpu_custom_call.1} parent=27 // pred_region
          %s499 = sand.u32 %s29, 1
          %s500 = scalar_lea.sflag [#allocation4], %s499
          %s501 = sand.u32 %s51, 1
          %s502 = smul.addr %s501, 16
          %s503 = scalar_lea.vmem [#allocation3], %s502
          %s505 = ssub.s32 256, 256
          %506 = vsyncadd %s500, %s505
          %s507 = smul.addr %s36, 2
          %s508 = smul.addr %s507, 128
          %s509 = scalar_lea.hbm %s0, %s508
          %s510 = sshll.u32 %s503, 4
          %s511 = int_to_ptr.vmem [resolvable:$true] %s510
          %516 = dma.hbm_to_vmem [thread:$0]  %s509, 256, %s511, %s500, 128, 128, 8
        $region32: #{tpu_custom_call.1} parent=27 // pred_fallthru
          _
        // Predicated region
        $region33: #{tpu_custom_call.1} parent=27 // pred_check
          %p517 = pneg %p150
        $region34: #{tpu_custom_call.1} parent=27 // pred_check_branch
          %519 = sbr.rel (%p517) target = $region36
        $region35: #{tpu_custom_call.1} parent=27 // pred_region
          %s520 = sand.u32 %s29, 1
          %s521 = scalar_lea.sflag [#allocation4], %s520
          %s522 = sand.u32 %s140, 1
          %s523 = smul.addr %s522, 16
          %s524 = scalar_lea.vmem [#allocation11], %s523
          %s526 = ssub.s32 256, 256
          %527 = vsyncadd %s521, %s526
          %s528 = smul.addr %s36, 2
          %s529 = smul.addr %s528, 128
          %s530 = scalar_lea.hbm %s4, %s529
          %s531 = sshll.u32 %s524, 4
          %s532 = int_to_ptr.vmem [resolvable:$true] %s531
          %537 = dma.hbm_to_vmem [thread:$0]  %s530, 256, %s532, %s521, 128, 128, 8
        $region36: #{tpu_custom_call.1} parent=27 // pred_fallthru
          _
        // Predicated region
        $region37: #{tpu_custom_call.1} parent=27 // pred_check
          %p538 = pneg %p176
        $region38: #{tpu_custom_call.1} parent=27 // pred_check_branch
          %540 = sbr.rel (%p538) target = $region40
        $region39: #{tpu_custom_call.1} parent=27 // pred_region
          %s541 = sand.u32 %s29, 1
          %s542 = scalar_lea.sflag [#allocation4], %s541
          %s543 = sand.u32 %s166, 1
          %s544 = smul.addr %s543, 192
          %s545 = scalar_lea.vmem [#allocation12], %s544
          %s547 = ssub.s32 3072, 3072
          %548 = vsyncadd %s542, %s547
          %s549 = smul.addr %s37, 48
          %s550 = smul.addr %s549, 64
          %s551 = scalar_lea.hbm %s5, %s550
          %s552 = sshll.u32 %s545, 4
          %s553 = int_to_ptr.vmem [resolvable:$true] %s552
          %558 = dma.hbm_to_vmem [thread:$0]  %s551, 3072, %s553, %s542, 192, 192, 12
        $region40: #{tpu_custom_call.1} parent=27 // pred_fallthru
          _
        // Predicated region
        $region41: #{tpu_custom_call.1} parent=27 // pred_check
          %p559 = pneg %p202
        $region42: #{tpu_custom_call.1} parent=27 // pred_check_branch
          %561 = sbr.rel (%p559) target = $region44
        $region43: #{tpu_custom_call.1} parent=27 // pred_region
          %s562 = sand.u32 %s29, 1
          %s563 = scalar_lea.sflag [#allocation4], %s562
          %s564 = sand.u32 %s192, 1
          %s565 = smul.addr %s564, 64
          %s566 = scalar_lea.vmem [#allocation13], %s565
          %s568 = ssub.s32 1024, 1024
          %569 = vsyncadd %s563, %s568
          %s570 = smul.addr %s37, 16
          %s571 = smul.addr %s570, 64
          %s572 = scalar_lea.hbm %s6, %s571
          %s573 = sshll.u32 %s566, 4
          %s574 = int_to_ptr.vmem [resolvable:$true] %s573
          %579 = dma.hbm_to_vmem [thread:$0]  %s572, 1024, %s574, %s563, 64, 64, 4
        $region44: #{tpu_custom_call.1} parent=27 // pred_fallthru
          _
        // Predicated region
        $region45: #{tpu_custom_call.1} parent=27 // pred_check
          %p580 = pneg %p228
        $region46: #{tpu_custom_call.1} parent=27 // pred_check_branch
          %582 = sbr.rel (%p580) target = $region48
        $region47: #{tpu_custom_call.1} parent=27 // pred_region
          %p583 = scmp.lt.s32.totalorder %s37, 1
          %s584 = scalar_select %p583, %s37, 1
          %s585 = scalar_lea.vmem %s7, %s584
        $region48: #{tpu_custom_call.1} parent=27 // pred_fallthru
          _
        // Predicated region
        $region49: #{tpu_custom_call.1} parent=27 // pred_check
          %p586 = pneg %p254
        $region50: #{tpu_custom_call.1} parent=27 // pred_check_branch
          %588 = sbr.rel (%p586) target = $region52
        $region51: #{tpu_custom_call.1} parent=27 // pred_region
          %p589 = scmp.lt.s32.totalorder %s37, 1
          %s590 = scalar_select %p589, %s37, 1
          %s591 = scalar_lea.vmem %s8, %s590
        $region52: #{tpu_custom_call.1} parent=27 // pred_fallthru
          _
        // Predicated region
        $region53: #{tpu_custom_call.1} parent=27 // pred_check
          %p592 = pneg %p280
        $region54: #{tpu_custom_call.1} parent=27 // pred_check_branch
          %594 = sbr.rel (%p592) target = $region56
        $region55: #{tpu_custom_call.1} parent=27 // pred_region
          %s595 = sand.u32 %s29, 1
          %s596 = scalar_lea.sflag [#allocation4], %s595
          %s597 = sand.u32 %s270, 1
          %s598 = smul.addr %s597, 256
          %s599 = scalar_lea.vmem [#allocation14], %s598
          %s601 = ssub.s32 4096, 4096
          %602 = vsyncadd %s596, %s601
          %s603 = smul.addr %s37, 64
          %s604 = smul.addr %s603, 64
          %s605 = scalar_lea.hbm %s9, %s604
          %s606 = sshll.u32 %s599, 4
          %s607 = int_to_ptr.vmem [resolvable:$true] %s606
          %612 = dma.hbm_to_vmem [thread:$0]  %s605, 4096, %s607, %s596, 256, 256, 16
        $region56: #{tpu_custom_call.1} parent=27 // pred_fallthru
          _
        // Predicated region
        $region57: #{tpu_custom_call.1} parent=27 // pred_check
          %p613 = pneg %p306
        $region58: #{tpu_custom_call.1} parent=27 // pred_check_branch
          %615 = sbr.rel (%p613) target = $region60
        $region59: #{tpu_custom_call.1} parent=27 // pred_region
          %p616 = scmp.lt.s32.totalorder %s37, 1
          %s617 = scalar_select %p616, %s37, 1
          %s618 = smul.addr %s617, 4
          %s619 = scalar_lea.vmem %s10, %s618
        $region60: #{tpu_custom_call.1} parent=27 // pred_fallthru
          _
        // Predicated region
        $region61: #{tpu_custom_call.1} parent=27 // pred_check
          %p620 = pneg %p332
        $region62: #{tpu_custom_call.1} parent=27 // pred_check_branch
          %622 = sbr.rel (%p620) target = $region64
        $region63: #{tpu_custom_call.1} parent=27 // pred_region
          %s623 = sand.u32 %s29, 1
          %s624 = scalar_lea.sflag [#allocation4], %s623
          %s625 = sand.u32 %s322, 1
          %s626 = smul.addr %s625, 256
          %s627 = scalar_lea.vmem [#allocation15], %s626
          %s629 = ssub.s32 4096, 4096
          %630 = vsyncadd %s624, %s629
          %s631 = smul.addr %s37, 64
          %s632 = smul.addr %s631, 64
          %s633 = scalar_lea.hbm %s11, %s632
          %s634 = sshll.u32 %s627, 4
          %s635 = int_to_ptr.vmem [resolvable:$true] %s634
          %640 = dma.hbm_to_vmem [thread:$0]  %s633, 4096, %s635, %s624, 64, 64, 4
        $region64: #{tpu_custom_call.1} parent=27 // pred_fallthru
          _
        // Predicated region
        $region65: #{tpu_custom_call.1} parent=27 // pred_check
          %p641 = pneg %p358
        $region66: #{tpu_custom_call.1} parent=27 // pred_check_branch
          %643 = sbr.rel (%p641) target = $region68
        $region67: #{tpu_custom_call.1} parent=27 // pred_region
          %p644 = scmp.lt.s32.totalorder %s37, 1
          %s645 = scalar_select %p644, %s37, 1
          %s646 = scalar_lea.vmem %s12, %s645
        $region68: #{tpu_custom_call.1} parent=27 // pred_fallthru
          _
        // Predicated region
        $region69: #{tpu_custom_call.1} parent=27 // pred_check
          %p647 = pneg %p384
        $region70: #{tpu_custom_call.1} parent=27 // pred_check_branch
          %649 = sbr.rel (%p647) target = $region72
        $region71: #{tpu_custom_call.1} parent=27 // pred_region
          %p650 = scmp.lt.s32.totalorder %s37, 1
          %s651 = scalar_select %p650, %s37, 1
          %s652 = scalar_lea.vmem %s13, %s651
        $region72: #{tpu_custom_call.1} parent=27 // pred_fallthru
          _
        // Predicated region
        $region73: #{tpu_custom_call.1} parent=27 // pred_check
          %p653 = pneg %p410
        $region74: #{tpu_custom_call.1} parent=27 // pred_check_branch
          %655 = sbr.rel (%p653) target = $region76
        $region75: #{tpu_custom_call.1} parent=27 // pred_region
          %p656 = scmp.lt.s32.totalorder %s37, 1
          %s657 = scalar_select %p656, %s37, 1
          %s658 = scalar_lea.vmem %s14, %s657
        $region76: #{tpu_custom_call.1} parent=27 // pred_fallthru
          _
      $region28: #{tpu_custom_call.1} parent=5 // pred_fallthru
        _
      %p659 = scmp.le.s32.totalorder 1, %s29
      %p660 = scmp.lt.s32.totalorder %s29, 5
      %p661 = pnand %p659, %p660
      %p662 = pneg %p661
      // Predicated region
      $region77: #{tpu_custom_call.1} parent=5 // pred_check
        _
      $region78: #{tpu_custom_call.1} parent=5 // pred_check_branch
        %664 = sbr.rel (%p661) target = $region80
      $region79: #{tpu_custom_call.1} parent=5 // pred_region
        %s665 = ssub.s32 %s29, 1
        %s666 = sand.u32 %s34, 1
        %s667 = scalar_lea.sflag [#allocation4], %s666
        %s668 = sand.u32 %s54, 1
        %s669 = smul.addr %s668, 16
        %s670 = scalar_lea.vmem [#allocation3], %s669
        // Predicated region
        $region81: #{tpu_custom_call.1} parent=79 // pred_check
          %p671 = pneg %p67
        $region82: #{tpu_custom_call.1} parent=79 // pred_check_branch
          %673 = sbr.rel (%p671) target = $region84
        $region83: #{tpu_custom_call.1} parent=79 // pred_region
          %674 = dma.done %s667, 256
        $region84: #{tpu_custom_call.1} parent=79 // pred_fallthru
          _
        // Predicated region
        $region85: #{tpu_custom_call.1} parent=79 // pred_check
          %p675 = pneg %p88
        $region86: #{tpu_custom_call.1} parent=79 // pred_check_branch
          %677 = sbr.rel (%p675) target = $region88
        $region87: #{tpu_custom_call.1} parent=79 // pred_region
          %678 = dma.done [#allocation7], 256
        $region88: #{tpu_custom_call.1} parent=79 // pred_fallthru
          _
        // Predicated region
        $region89: #{tpu_custom_call.1} parent=79 // pred_check
          %p679 = pneg %p109
        $region90: #{tpu_custom_call.1} parent=79 // pred_check_branch
          %681 = sbr.rel (%p679) target = $region92
        $region91: #{tpu_custom_call.1} parent=79 // pred_region
          %682 = dma.done [#allocation7], 16
        $region92: #{tpu_custom_call.1} parent=79 // pred_fallthru
          _
        // Predicated region
        $region93: #{tpu_custom_call.1} parent=79 // pred_check
          %p683 = pneg %p130
        $region94: #{tpu_custom_call.1} parent=79 // pred_check_branch
          %685 = sbr.rel (%p683) target = $region96
        $region95: #{tpu_custom_call.1} parent=79 // pred_region
          %686 = dma.done [#allocation10], 16
        $region96: #{tpu_custom_call.1} parent=79 // pred_fallthru
          _
        %s687 = sand.u32 %s34, 1
        %s688 = scalar_lea.sflag [#allocation4], %s687
        %s689 = sand.u32 %s143, 1
        %s690 = smul.addr %s689, 16
        %s691 = scalar_lea.vmem [#allocation11], %s690
        // Predicated region
        $region97: #{tpu_custom_call.1} parent=79 // pred_check
          %p692 = pneg %p156
        $region98: #{tpu_custom_call.1} parent=79 // pred_check_branch
          %694 = sbr.rel (%p692) target = $region100
        $region99: #{tpu_custom_call.1} parent=79 // pred_region
          %695 = dma.done %s688, 256
        $region100: #{tpu_custom_call.1} parent=79 // pred_fallthru
          _
        %s696 = sand.u32 %s34, 1
        %s697 = scalar_lea.sflag [#allocation4], %s696
        %s698 = sand.u32 %s169, 1
        %s699 = smul.addr %s698, 192
        %s700 = scalar_lea.vmem [#allocation12], %s699
        // Predicated region
        $region101: #{tpu_custom_call.1} parent=79 // pred_check
          %p701 = pneg %p182
        $region102: #{tpu_custom_call.1} parent=79 // pred_check_branch
          %703 = sbr.rel (%p701) target = $region104
        $region103: #{tpu_custom_call.1} parent=79 // pred_region
          %704 = dma.done %s697, 3072
        $region104: #{tpu_custom_call.1} parent=79 // pred_fallthru
          _
        %s705 = sand.u32 %s34, 1
        %s706 = scalar_lea.sflag [#allocation4], %s705
        %s707 = sand.u32 %s195, 1
        %s708 = smul.addr %s707, 64
        %s709 = scalar_lea.vmem [#allocation13], %s708
        // Predicated region
        $region105: #{tpu_custom_call.1} parent=79 // pred_check
          %p710 = pneg %p208
        $region106: #{tpu_custom_call.1} parent=79 // pred_check_branch
          %712 = sbr.rel (%p710) target = $region108
        $region107: #{tpu_custom_call.1} parent=79 // pred_region
          %713 = dma.done %s706, 1024
        $region108: #{tpu_custom_call.1} parent=79 // pred_fallthru
          _
        %s714 = sand.u32 %s34, 1
        %s715 = scalar_lea.sflag [#allocation4], %s714
        %s716 = sand.u32 %s273, 1
        %s717 = smul.addr %s716, 256
        %s718 = scalar_lea.vmem [#allocation14], %s717
        // Predicated region
        $region109: #{tpu_custom_call.1} parent=79 // pred_check
          %p719 = pneg %p286
        $region110: #{tpu_custom_call.1} parent=79 // pred_check_branch
          %721 = sbr.rel (%p719) target = $region112
        $region111: #{tpu_custom_call.1} parent=79 // pred_region
          %722 = dma.done %s715, 4096
        $region112: #{tpu_custom_call.1} parent=79 // pred_fallthru
          _
        %s723 = sand.u32 %s34, 1
        %s724 = scalar_lea.sflag [#allocation4], %s723
        %s725 = sand.u32 %s325, 1
        %s726 = smul.addr %s725, 256
        %s727 = scalar_lea.vmem [#allocation15], %s726
        // Predicated region
        $region113: #{tpu_custom_call.1} parent=79 // pred_check
          %p728 = pneg %p338
        $region114: #{tpu_custom_call.1} parent=79 // pred_check_branch
          %730 = sbr.rel (%p728) target = $region116
        $region115: #{tpu_custom_call.1} parent=79 // pred_region
          %731 = dma.done %s724, 4096
        $region116: #{tpu_custom_call.1} parent=79 // pred_fallthru
          _
        %s732 = sand.u32 %s34, 1
        %s733 = scalar_lea.sflag [#allocation4], %s732
        %s734 = sand.u32 %s54, 1
        %s735 = smul.addr %s734, 16
        %s736 = scalar_lea.vmem [#allocation3], %s735
        %p737 = pneg %p67
        %p738 = pneg %p64
        %p739 = pneg %p88
        %p740 = pneg %p85
        %p741 = pneg %p109
        %p742 = pneg %p106
        %p743 = pneg %p130
        %p744 = pneg %p127
        %s745 = sand.u32 %s34, 1
        %s746 = scalar_lea.sflag [#allocation4], %s745
        %s747 = sand.u32 %s143, 1
        %s748 = smul.addr %s747, 16
        %s749 = scalar_lea.vmem [#allocation11], %s748
        %p750 = pneg %p156
        %p751 = pneg %p153
        %s752 = sand.u32 %s34, 1
        %s753 = scalar_lea.sflag [#allocation4], %s752
        %s754 = sand.u32 %s169, 1
        %s755 = smul.addr %s754, 192
        %s756 = scalar_lea.vmem [#allocation12], %s755
        %p757 = pneg %p182
        %p758 = pneg %p179
        %s759 = sand.u32 %s34, 1
        %s760 = scalar_lea.sflag [#allocation4], %s759
        %s761 = sand.u32 %s195, 1
        %s762 = smul.addr %s761, 64
        %s763 = scalar_lea.vmem [#allocation13], %s762
        %p764 = pneg %p208
        %p765 = pneg %p205
        %p766 = scmp.lt.s32.totalorder %s39, 1
        %s767 = scalar_select %p766, %s39, 1
        %s768 = scalar_lea.vmem %s7, %s767
        %p769 = pneg %p234
        %p770 = pneg %p231
        %p771 = scmp.lt.s32.totalorder %s39, 1
        %s772 = scalar_select %p771, %s39, 1
        %s773 = scalar_lea.vmem %s8, %s772
        %p774 = pneg %p260
        %p775 = pneg %p257
        %s776 = sand.u32 %s34, 1
        %s777 = scalar_lea.sflag [#allocation4], %s776
        %s778 = sand.u32 %s273, 1
        %s779 = smul.addr %s778, 256
        %s780 = scalar_lea.vmem [#allocation14], %s779
        %p781 = pneg %p286
        %p782 = pneg %p283
        %p783 = scmp.lt.s32.totalorder %s39, 1
        %s784 = scalar_select %p783, %s39, 1
        %s785 = smul.addr %s784, 4
        %s786 = scalar_lea.vmem %s10, %s785
        %p787 = pneg %p312
        %p788 = pneg %p309
        %s789 = sand.u32 %s34, 1
        %s790 = scalar_lea.sflag [#allocation4], %s789
        %s791 = sand.u32 %s325, 1
        %s792 = smul.addr %s791, 256
        %s793 = scalar_lea.vmem [#allocation15], %s792
        %p794 = pneg %p338
        %p795 = pneg %p335
        %p796 = scmp.lt.s32.totalorder %s39, 1
        %s797 = scalar_select %p796, %s39, 1
        %s798 = scalar_lea.vmem %s12, %s797
        %p799 = pneg %p364
        %p800 = pneg %p361
        %p801 = scmp.lt.s32.totalorder %s39, 1
        %s802 = scalar_select %p801, %s39, 1
        %s803 = scalar_lea.vmem %s13, %s802
        %p804 = pneg %p390
        %p805 = pneg %p387
        %p806 = scmp.lt.s32.totalorder %s39, 1
        %s807 = scalar_select %p806, %s39, 1
        %s808 = scalar_lea.vmem %s14, %s807
        %p809 = pneg %p416
        %p810 = pneg %p413
        %p811 = pneg %p442
        %p812 = pneg %p439
        %s813 = sand.u32 %s429, 1
        %s814 = scalar_lea.sflag [#allocation5], %s813
        %s815 = sand.u32 %s429, 1
        %s816 = smul.addr %s815, 16
        %s817 = scalar_lea.vmem [#allocation16], %s816
        %p818 = scmp.lt.s32.totalorder %s39, 1
        %s819 = scalar_select %p818, %s39, 1
        %s820 = scalar_lea.vmem %s7, %s819
        %p821 = scmp.lt.s32.totalorder %s39, 1
        %s822 = scalar_select %p821, %s39, 1
        %s823 = scalar_lea.vmem %s8, %s822
        %p824 = scmp.lt.s32.totalorder %s39, 1
        %s825 = scalar_select %p824, %s39, 1
        %s826 = smul.addr %s825, 4
        %s827 = scalar_lea.vmem %s10, %s826
        %p828 = scmp.lt.s32.totalorder %s39, 1
        %s829 = scalar_select %p828, %s39, 1
        %s830 = scalar_lea.vmem %s12, %s829
        %p831 = scmp.lt.s32.totalorder %s39, 1
        %s832 = scalar_select %p831, %s39, 1
        %s833 = scalar_lea.vmem %s13, %s832
        %p834 = scmp.lt.s32.totalorder %s39, 1
        %s835 = scalar_select %p834, %s39, 1
        %s836 = scalar_lea.vmem %s14, %s835
        %p838 = scmp.eq.s32.totalorder %s39, 0
        // Predicated region
        $region117: #{tpu_custom_call.1} parent=79 // pred_check
          %p839 = pneg %p838
        $region118: #{tpu_custom_call.1} parent=79 // pred_check_branch
          %841 = sbr.rel (%p839) target = $region120
        $region119: #{tpu_custom_call.1} parent=79 // pred_region
          %v842 = vld [vmem:[%s670] sm:$0xff]
          %v843 = vld [vmem:[%s670 + $0x8] sm:$0xff]
          %v844 = vld [vmem:[#allocation6] sm:$0xff]
          %v845 = vld [vmem:[#allocation6 + $0x8] sm:$0xff]
          %v846 = vadd.f32 %v842, %v844
          %v847 = vadd.f32 %v843, %v845
          %v848 = vld [vmem:[#allocation8] sm:$0x1]
          %v849 = vld [vmem:[#allocation9] sm:$0x1]
          %850 = vadd.xlane.f32.xlu0 %v846
          %v851 = vpop.xlane.xlu0 %850
          %852 = vadd.xlane.f32.xlu0 %v847
          %v853 = vpop.xlane.xlu0 %852
          %v854 = vrcp.pop 128.0
          %v855 = vmul.f32 %v851, %v854
          %v856 = vmul.f32 %v853, %v854
          %v857 = vsub.f32 %v846, %v855
          %v858 = vsub.f32 %v847, %v856
          %v859 = vmul.f32 %v857, %v857
          %v860 = vmul.f32 %v858, %v858
          %861 = vadd.xlane.f32.xlu0 %v859
          %v862 = vpop.xlane.xlu0 %861
          %863 = vadd.xlane.f32.xlu0 %v860
          %v864 = vpop.xlane.xlu0 %863
          %v865 = vmul.f32 %v862, %v854
          %v866 = vmul.f32 %v864, %v854
          %v867 = vadd.f32 %v865, 1e-06
          %v868 = vadd.f32 %v866, 1e-06
          %v869 = vrsqrt.pop %v867
          %v870 = vrsqrt.pop %v868
          %v871 = vmul.f32 %v857, %v869
          %v872 = vmul.f32 %v858, %v870
          %v874 = vlaneseq
          %v875 = vshrl.u32 %v874, 7
          %v876 = vsub.s32 0, %v875
          %v877 = vrot.slane %v848, %v876
          %v879 = vmul.f32 %v871, %v877
          %v880 = vmul.f32 %v872, %v877
          %v882 = vlaneseq
          %v883 = vshrl.u32 %v882, 7
          %v884 = vsub.s32 0, %v883
          %v885 = vrot.slane %v849, %v884
          %v887 = vadd.f32 %v879, %v885
          %v888 = vadd.f32 %v880, %v885
          %889 = vst [vmem:[#allocation2] sm:$0xff] %v887
          %890 = vst [vmem:[#allocation2 + $0x8] sm:$0xff] %v888
        $region120: #{tpu_custom_call.1} parent=79 // pred_fallthru
          _
        %v891 = vld [vmem:[#allocation2] sm:$0xff]
        %v892 = vld [vmem:[#allocation2 + $0x8] sm:$0xff]
        %v893 = vpack.c.bf16 %v892, %v891
        %v894 = vld [vmem:[%s691] sm:$0xff]
        %v895 = vld [vmem:[%s691 + $0x8] sm:$0xff]
        %v896 = vld [vmem:[%s700] sm:$0xff]
        %v897 = vld [vmem:[%s700 + $0x8] sm:$0xf]
        %v898 = vld [vmem:[%s700 + $0xc] sm:$0xff]
        %v899 = vld [vmem:[%s700 + $0x14] sm:$0xf]
        %v900 = vld [vmem:[%s700 + $0x18] sm:$0xff]
        %v901 = vld [vmem:[%s700 + $0x20] sm:$0xf]
        %v902 = vld [vmem:[%s700 + $0x24] sm:$0xff]
        %v903 = vld [vmem:[%s700 + $0x2c] sm:$0xf]
        %v904 = vld [vmem:[%s700 + $0x30] sm:$0xff]
        %v905 = vld [vmem:[%s700 + $0x38] sm:$0xf]
        %v906 = vld [vmem:[%s700 + $0x3c] sm:$0xff]
        %v907 = vld [vmem:[%s700 + $0x44] sm:$0xf]
        %v908 = vld [vmem:[%s700 + $0x48] sm:$0xff]
        %v909 = vld [vmem:[%s700 + $0x50] sm:$0xf]
        %v910 = vld [vmem:[%s700 + $0x54] sm:$0xff]
        %v911 = vld [vmem:[%s700 + $0x5c] sm:$0xf]
        %v912 = vld [vmem:[%s700 + $0x60] sm:$0xff]
        %v913 = vld [vmem:[%s700 + $0x68] sm:$0xf]
        %v914 = vld [vmem:[%s700 + $0x6c] sm:$0xff]
        %v915 = vld [vmem:[%s700 + $0x74] sm:$0xf]
        %v916 = vld [vmem:[%s700 + $0x78] sm:$0xff]
        %v917 = vld [vmem:[%s700 + $0x80] sm:$0xf]
        %v918 = vld [vmem:[%s700 + $0x84] sm:$0xff]
        %v919 = vld [vmem:[%s700 + $0x8c] sm:$0xf]
        %v920 = vld [vmem:[%s700 + $0x90] sm:$0xff]
        %v921 = vld [vmem:[%s700 + $0x98] sm:$0xf]
        %v922 = vld [vmem:[%s700 + $0x9c] sm:$0xff]
        %v923 = vld [vmem:[%s700 + $0xa4] sm:$0xf]
        %v924 = vld [vmem:[%s700 + $0xa8] sm:$0xff]
        %v925 = vld [vmem:[%s700 + $0xb0] sm:$0xf]
        %v926 = vld [vmem:[%s700 + $0xb4] sm:$0xff]
        %v927 = vld [vmem:[%s700 + $0xbc] sm:$0xf]
        %v960 = vunpack.c.l.b16 %v896
        %v961 = vunpack.c.h.b16 %v896
        %v962 = vunpack.c.l.b16 %v897
        %v963 = vunpack.c.l.b16 %v898
        %v964 = vunpack.c.h.b16 %v898
        %v965 = vunpack.c.l.b16 %v899
        %v966 = vunpack.c.l.b16 %v900
        %v967 = vunpack.c.h.b16 %v900
        %v968 = vunpack.c.l.b16 %v901
        %v969 = vunpack.c.l.b16 %v902
        %v970 = vunpack.c.h.b16 %v902
        %v971 = vunpack.c.l.b16 %v903
        %v972 = vunpack.c.l.b16 %v904
        %v973 = vunpack.c.h.b16 %v904
        %v974 = vunpack.c.l.b16 %v905
        %v975 = vunpack.c.l.b16 %v906
        %v976 = vunpack.c.h.b16 %v906
        %v977 = vunpack.c.l.b16 %v907
        %v978 = vunpack.c.l.b16 %v908
        %v979 = vunpack.c.h.b16 %v908
        %v980 = vunpack.c.l.b16 %v909
        %v981 = vunpack.c.l.b16 %v910
        %v982 = vunpack.c.h.b16 %v910
        %v983 = vunpack.c.l.b16 %v911
        %v984 = vunpack.c.l.b16 %v912
        %v985 = vunpack.c.h.b16 %v912
        %v986 = vunpack.c.l.b16 %v913
        %v987 = vunpack.c.l.b16 %v914
        %v988 = vunpack.c.h.b16 %v914
        %v989 = vunpack.c.l.b16 %v915
        %v990 = vunpack.c.l.b16 %v916
        %v991 = vunpack.c.h.b16 %v916
        %v992 = vunpack.c.l.b16 %v917
        %v993 = vunpack.c.l.b16 %v918
        %v994 = vunpack.c.h.b16 %v918
        %v995 = vunpack.c.l.b16 %v919
        %v996 = vunpack.c.l.b16 %v920
        %v997 = vunpack.c.h.b16 %v920
        %v998 = vunpack.c.l.b16 %v921
        %v999 = vunpack.c.l.b16 %v922
        %v1000 = vunpack.c.h.b16 %v922
        %v1001 = vunpack.c.l.b16 %v923
        %v1002 = vunpack.c.l.b16 %v924
        %v1003 = vunpack.c.h.b16 %v924
        %v1004 = vunpack.c.l.b16 %v925
        %v1005 = vunpack.c.l.b16 %v926
        %v1006 = vunpack.c.h.b16 %v926
        %v1007 = vunpack.c.l.b16 %v927
        %v1008 = vpack.c.b16 %v963, %v960
        %v1009 = vpack.c.b16 %v964, %v961
        %v1010 = vpack.c.b16 %v965, %v962
        %v1011 = vpack.c.b16 %v969, %v966
        %v1012 = vpack.c.b16 %v970, %v967
        %v1013 = vpack.c.b16 %v971, %v968
        %v1014 = vpack.c.b16 %v975, %v972
        %v1015 = vpack.c.b16 %v976, %v973
        %v1016 = vpack.c.b16 %v977, %v974
        %v1017 = vpack.c.b16 %v981, %v978
        %v1018 = vpack.c.b16 %v982, %v979
        %v1019 = vpack.c.b16 %v983, %v980
        %v1020 = vpack.c.b16 %v987, %v984
        %v1021 = vpack.c.b16 %v988, %v985
        %v1022 = vpack.c.b16 %v989, %v986
        %v1023 = vpack.c.b16 %v993, %v990
        %v1024 = vpack.c.b16 %v994, %v991
        %v1025 = vpack.c.b16 %v995, %v992
        %v1026 = vpack.c.b16 %v999, %v996
        %v1027 = vpack.c.b16 %v1000, %v997
        %v1028 = vpack.c.b16 %v1001, %v998
        %v1029 = vpack.c.b16 %v1005, %v1002
        %v1030 = vpack.c.b16 %v1006, %v1003
        %v1031 = vpack.c.b16 %v1007, %v1004
        %1056 = vmatprep.subr.bf16.mxu0 %v1009
        %1057 = vmatpush1.bf16.msra.mxu0 %v1008
        %1058 = vmatprep.subr.bf16.mxu0 %v1012
        %1059 = vmatpush1.bf16.msra.mxu0 %v1011
        %1060 = vmatprep.subr.bf16.mxu0 %v1015
        %1061 = vmatpush1.bf16.msra.mxu0 %v1014
        %1062 = vmatprep.subr.bf16.mxu0 %v1018
        %1063 = vmatpush1.bf16.msra.mxu0 %v1017
        %1064 = vmatprep.subr.bf16.mxu0 %v1021
        %1065 = vmatpush1.bf16.msra.mxu0 %v1020
        %1066 = vmatprep.subr.bf16.mxu0 %v1024
        %1067 = vmatpush1.bf16.msra.mxu0 %v1023
        %1068 = vmatprep.subr.bf16.mxu0 %v1027
        %1069 = vmatpush1.bf16.msra.mxu0 %v1026
        %1070 = vmatprep.subr.bf16.mxu0 %v1030
        %1071 = vmatpush1.bf16.msra.mxu0 %v1029
        %1072 = vmatprep.subr.bf16.mxu0 0
        %1073 = vmatpush1.bf16.msra.mxu0 0
        %1074 = vmatprep.subr.bf16.mxu0 0
        %1075 = vmatpush1.bf16.msra.mxu0 0
        %1076 = vmatprep.subr.bf16.mxu0 0
        %1077 = vmatpush1.bf16.msra.mxu0 0
        %1078 = vmatprep.subr.bf16.mxu0 0
        %1079 = vmatpush1.bf16.msra.mxu0 0
        %1080 = vmatprep.subr.bf16.mxu0 0
        %1081 = vmatpush1.bf16.msra.mxu0 0
        %1082 = vmatprep.subr.bf16.mxu0 0
        %1083 = vmatpush1.bf16.msra.mxu0 0
        %1084 = vmatprep.subr.bf16.mxu0 0
        %1085 = vmatpush1.bf16.msra.mxu0 0
        %1086 = vmatprep.subr.bf16.mxu0 0
        %1087 = vmatpush1.bf16.msra.mxu0 0
        %1088 = vmatprep.mubr.bf16.mxu0 0
        %1089 = vmatmul.mubr.bf16.gmra.mrb[0].mxu0 %v893
        %v1090 = vpop.f32.mrb[0].mxu0
        %v1091 = vadd.f32 0.0, %v1090
        %v1092 = vpop.f32.mrb[0].mxu0
        %v1093 = vadd.f32 0.0, %v1092
        %v1094 = vpop.f32.mrb[0].mxu0
        %v1095 = vadd.f32 0.0, %v1094
        %v1096 = vpop.f32.mrb[0].mxu0
        %v1097 = vadd.f32 0.0, %v1096
        %1098 = vdwg.mxu0
        %1099 = vmatprep.subr.bf16.mxu0 0
        %1100 = vmatpush1.bf16.msra.mxu0 %v1010
        %1101 = vmatprep.subr.bf16.mxu0 0
        %1102 = vmatpush1.bf16.msra.mxu0 %v1013
        %1103 = vmatprep.subr.bf16.mxu0 0
        %1104 = vmatpush1.bf16.msra.mxu0 %v1016
        %1105 = vmatprep.subr.bf16.mxu0 0
        %1106 = vmatpush1.bf16.msra.mxu0 %v1019
        %1107 = vmatprep.subr.bf16.mxu0 0
        %1108 = vmatpush1.bf16.msra.mxu0 %v1022
        %1109 = vmatprep.subr.bf16.mxu0 0
        %1110 = vmatpush1.bf16.msra.mxu0 %v1025
        %1111 = vmatprep.subr.bf16.mxu0 0
        %1112 = vmatpush1.bf16.msra.mxu0 %v1028
        %1113 = vmatprep.subr.bf16.mxu0 0
        %1114 = vmatpush1.bf16.msra.mxu0 %v1031
        %1115 = vmatprep.subr.bf16.mxu0 0
        %1116 = vmatpush1.bf16.msra.mxu0 0
        %1117 = vmatprep.subr.bf16.mxu0 0
        %1118 = vmatpush1.bf16.msra.mxu0 0
        %1119 = vmatprep.subr.bf16.mxu0 0
        %1120 = vmatpush1.bf16.msra.mxu0 0
        %1121 = vmatprep.subr.bf16.mxu0 0
        %1122 = vmatpush1.bf16.msra.mxu0 0
        %1123 = vmatprep.subr.bf16.mxu0 0
        %1124 = vmatpush1.bf16.msra.mxu0 0
        %1125 = vmatprep.subr.bf16.mxu0 0
        %1126 = vmatpush1.bf16.msra.mxu0 0
        %1127 = vmatprep.subr.bf16.mxu0 0
        %1128 = vmatpush1.bf16.msra.mxu0 0
        %1129 = vmatprep.subr.bf16.mxu0 0
        %1130 = vmatpush1.bf16.msra.mxu0 0
        %1131 = vmatprep.mubr.bf16.mxu0 0
        %1132 = vmatmul.mubr.bf16.gmra.mrb[0].mxu0 %v893
        %v1133 = vpop.f32.mrb[0].mxu0
        %v1134 = vadd.f32 0.0, %v1133
        %v1135 = vpop.f32.mrb[0].mxu0
        %v1136 = vpop.f32.mrb[0].mxu0
        %v1137 = vadd.f32 0.0, %v1136
        %v1138 = vpop.f32.mrb[0].mxu0
        %1139 = vdwg.mxu0
        %1142 = vrot.lane.b32.xlu0 %v1091, 96
        %v1143 = vpop.permute.xlu0 %1142
        %1144 = vrot.lane.b32.xlu0 %v1095, 96
        %v1145 = vpop.permute.xlu0 %1144
        %1148 = vrot.lane.b32.xlu0 %v1091, 64
        %v1149 = vpop.permute.xlu0 %1148
        %1150 = vrot.lane.b32.xlu0 %v1095, 64
        %v1151 = vpop.permute.xlu0 %1150
        %1154 = vrot.lane.b32.xlu0 %v1091, 32
        %v1155 = vpop.permute.xlu0 %1154
        %1156 = vrot.lane.b32.xlu0 %v1095, 32
        %v1157 = vpop.permute.xlu0 %1156
        %1162 = vrot.lane.b32.xlu0 %v1093, 96
        %v1163 = vpop.permute.xlu0 %1162
        %1164 = vrot.lane.b32.xlu0 %v1097, 96
        %v1165 = vpop.permute.xlu0 %1164
        %1168 = vrot.lane.b32.xlu0 %v1093, 64
        %v1169 = vpop.permute.xlu0 %1168
        %1170 = vrot.lane.b32.xlu0 %v1097, 64
        %v1171 = vpop.permute.xlu0 %1170
        %1174 = vrot.lane.b32.xlu0 %v1093, 32
        %v1175 = vpop.permute.xlu0 %1174
        %1176 = vrot.lane.b32.xlu0 %v1097, 32
        %v1177 = vpop.permute.xlu0 %1176
        %1182 = vrot.lane.b32.xlu0 %v1134, 96
        %v1183 = vpop.permute.xlu0 %1182
        %1184 = vrot.lane.b32.xlu0 %v1137, 96
        %v1185 = vpop.permute.xlu0 %1184
        %1188 = vrot.lane.b32.xlu0 %v1134, 64
        %v1189 = vpop.permute.xlu0 %1188
        %1190 = vrot.lane.b32.xlu0 %v1137, 64
        %v1191 = vpop.permute.xlu0 %1190
        %1194 = vrot.lane.b32.xlu0 %v1134, 32
        %v1195 = vpop.permute.xlu0 %1194
        %1196 = vrot.lane.b32.xlu0 %v1137, 32
        %v1197 = vpop.permute.xlu0 %1196
        %v1200 = vpack.c.bf16 %v1095, %v1091
        %v1201 = vpack.c.bf16 %v1145, %v1143
        %v1202 = vpack.c.bf16 %v1151, %v1149
        %v1203 = vpack.c.bf16 %v1157, %v1155
        %v1204 = vpack.c.bf16 %v1097, %v1093
        %v1205 = vpack.c.bf16 %v1165, %v1163
        %v1206 = vpack.c.bf16 %v1171, %v1169
        %v1207 = vpack.c.bf16 %v1177, %v1175
        %vm1208 = vcmask 261120
        %v1210 = vsel %vm1208, %v1200, 0
        %v1213 = vsel %vm1208, %v1204, 0
        %1215 = vmatprep.subr.bf16.mxu0 0
        %1216 = vmatpush1.bf16.xpose.msra.mxu0 %v1213
        %1217 = vmatprep.subr.bf16.mxu0 0
        %1218 = vmatpush1.bf16.xpose.msra.mxu0 0
        %1219 = vmatprep.subr.bf16.mxu0 0
        %1220 = vmatpush1.bf16.xpose.msra.mxu0 0
        %1221 = vmatprep.subr.bf16.mxu0 0
        %1222 = vmatpush1.bf16.xpose.msra.mxu0 0
        %1223 = vmatprep.subr.bf16.mxu0 0
        %1224 = vmatpush1.bf16.xpose.msra.mxu0 0
        %1225 = vmatprep.subr.bf16.mxu0 0
        %1226 = vmatpush1.bf16.xpose.msra.mxu0 0
        %1227 = vmatprep.subr.bf16.mxu0 0
        %1228 = vmatpush1.bf16.xpose.msra.mxu0 0
        %1229 = vmatprep.subr.bf16.mxu0 0
        %1230 = vmatpush1.bf16.xpose.msra.mxu0 0
        %1231 = vmatprep.subr.bf16.mxu0 0
        %1232 = vmatpush1.bf16.xpose.msra.mxu0 0
        %1233 = vmatprep.subr.bf16.mxu0 0
        %1234 = vmatpush1.bf16.xpose.msra.mxu0 0
        %1235 = vmatprep.subr.bf16.mxu0 0
        %1236 = vmatpush1.bf16.xpose.msra.mxu0 0
        %1237 = vmatprep.subr.bf16.mxu0 0
        %1238 = vmatpush1.bf16.xpose.msra.mxu0 0
        %1239 = vmatprep.subr.bf16.mxu0 0
        %1240 = vmatpush1.bf16.xpose.msra.mxu0 0
        %1241 = vmatprep.subr.bf16.mxu0 0
        %1242 = vmatpush1.bf16.xpose.msra.mxu0 0
        %1243 = vmatprep.subr.bf16.mxu0 0
        %1244 = vmatpush1.bf16.xpose.msra.mxu0 0
        %1245 = vmatprep.subr.bf16.mxu0 0
        %1246 = vmatpush1.bf16.xpose.msra.mxu0 0
        %1247 = vmatprep.mubr.bf16.mxu0 0
        %1248 = vmatmul.mubr.bf16.gmra.mrb[0].mxu0 %v1210
        %v1249 = vpop.f32.mrb[0].mxu0
        %v1250 = vadd.f32 0.0, %v1249
        %v1251 = vpop.f32.mrb[0].mxu0
        %v1252 = vpop.f32.mrb[0].mxu0
        %v1253 = vadd.f32 0.0, %v1252
        %v1254 = vpop.f32.mrb[0].mxu0
        %1255 = vdwg.mxu0
        %v1257 = vsel %vm1208, %v1201, 0
        %v1260 = vsel %vm1208, %v1205, 0
        %1262 = vmatprep.subr.bf16.mxu0 0
        %1263 = vmatpush1.bf16.xpose.msra.mxu0 %v1260
        %1264 = vmatprep.subr.bf16.mxu0 0
        %1265 = vmatpush1.bf16.xpose.msra.mxu0 0
        %1266 = vmatprep.subr.bf16.mxu0 0
        %1267 = vmatpush1.bf16.xpose.msra.mxu0 0
        %1268 = vmatprep.subr.bf16.mxu0 0
        %1269 = vmatpush1.bf16.xpose.msra.mxu0 0
        %1270 = vmatprep.subr.bf16.mxu0 0
        %1271 = vmatpush1.bf16.xpose.msra.mxu0 0
        %1272 = vmatprep.subr.bf16.mxu0 0
        %1273 = vmatpush1.bf16.xpose.msra.mxu0 0
        %1274 = vmatprep.subr.bf16.mxu0 0
        %1275 = vmatpush1.bf16.xpose.msra.mxu0 0
        %1276 = vmatprep.subr.bf16.mxu0 0
        %1277 = vmatpush1.bf16.xpose.msra.mxu0 0
        %1278 = vmatprep.subr.bf16.mxu0 0
        %1279 = vmatpush1.bf16.xpose.msra.mxu0 0
        %1280 = vmatprep.subr.bf16.mxu0 0
        %1281 = vmatpush1.bf16.xpose.msra.mxu0 0
        %1282 = vmatprep.subr.bf16.mxu0 0
        %1283 = vmatpush1.bf16.xpose.msra.mxu0 0
        %1284 = vmatprep.subr.bf16.mxu0 0
        %1285 = vmatpush1.bf16.xpose.msra.mxu0 0
        %1286 = vmatprep.subr.bf16.mxu0 0
        %1287 = vmatpush1.bf16.xpose.msra.mxu0 0
        %1288 = vmatprep.subr.bf16.mxu0 0
        %1289 = vmatpush1.bf16.xpose.msra.mxu0 0
        %1290 = vmatprep.subr.bf16.mxu0 0
        %1291 = vmatpush1.bf16.xpose.msra.mxu0 0
        %1292 = vmatprep.subr.bf16.mxu0 0
        %1293 = vmatpush1.bf16.xpose.msra.mxu0 0
        %1294 = vmatprep.mubr.bf16.mxu0 0
        %1295 = vmatmul.mubr.bf16.gmra.mrb[0].mxu0 %v1257
        %v1296 = vpop.f32.mrb[0].mxu0
        %v1297 = vadd.f32 0.0, %v1296
        %v1298 = vpop.f32.mrb[0].mxu0
        %v1299 = vpop.f32.mrb[0].mxu0
        %v1300 = vadd.f32 0.0, %v1299
        %v1301 = vpop.f32.mrb[0].mxu0
        %1302 = vdwg.mxu0
        %v1304 = vsel %vm1208, %v1202, 0
        %v1307 = vsel %vm1208, %v1206, 0
        %1309 = vmatprep.subr.bf16.mxu0 0
        %1310 = vmatpush1.bf16.xpose.msra.mxu0 %v1307
        %1311 = vmatprep.subr.bf16.mxu0 0
        %1312 = vmatpush1.bf16.xpose.msra.mxu0 0
        %1313 = vmatprep.subr.bf16.mxu0 0
        %1314 = vmatpush1.bf16.xpose.msra.mxu0 0
        %1315 = vmatprep.subr.bf16.mxu0 0
        %1316 = vmatpush1.bf16.xpose.msra.mxu0 0
        %1317 = vmatprep.subr.bf16.mxu0 0
        %1318 = vmatpush1.bf16.xpose.msra.mxu0 0
        %1319 = vmatprep.subr.bf16.mxu0 0
        %1320 = vmatpush1.bf16.xpose.msra.mxu0 0
        %1321 = vmatprep.subr.bf16.mxu0 0
        %1322 = vmatpush1.bf16.xpose.msra.mxu0 0
        %1323 = vmatprep.subr.bf16.mxu0 0
        %1324 = vmatpush1.bf16.xpose.msra.mxu0 0
        %1325 = vmatprep.subr.bf16.mxu0 0
        %1326 = vmatpush1.bf16.xpose.msra.mxu0 0
        %1327 = vmatprep.subr.bf16.mxu0 0
        %1328 = vmatpush1.bf16.xpose.msra.mxu0 0
        %1329 = vmatprep.subr.bf16.mxu0 0
        %1330 = vmatpush1.bf16.xpose.msra.mxu0 0
        %1331 = vmatprep.subr.bf16.mxu0 0
        %1332 = vmatpush1.bf16.xpose.msra.mxu0 0
        %1333 = vmatprep.subr.bf16.mxu0 0
        %1334 = vmatpush1.bf16.xpose.msra.mxu0 0
        %1335 = vmatprep.subr.bf16.mxu0 0
        %1336 = vmatpush1.bf16.xpose.msra.mxu0 0
        %1337 = vmatprep.subr.bf16.mxu0 0
        %1338 = vmatpush1.bf16.xpose.msra.mxu0 0
        %1339 = vmatprep.subr.bf16.mxu0 0
        %1340 = vmatpush1.bf16.xpose.msra.mxu0 0
        %1341 = vmatprep.mubr.bf16.mxu0 0
        %1342 = vmatmul.mubr.bf16.gmra.mrb[0].mxu0 %v1304
        %v1343 = vpop.f32.mrb[0].mxu0
        %v1344 = vadd.f32 0.0, %v1343
        %v1345 = vpop.f32.mrb[0].mxu0
        %v1346 = vpop.f32.mrb[0].mxu0
        %v1347 = vadd.f32 0.0, %v1346
        %v1348 = vpop.f32.mrb[0].mxu0
        %1349 = vdwg.mxu0
        %v1351 = vsel %vm1208, %v1203, 0
        %v1354 = vsel %vm1208, %v1207, 0
        %1356 = vmatprep.subr.bf16.mxu0 0
        %1357 = vmatpush1.bf16.xpose.msra.mxu0 %v1354
        %1358 = vmatprep.subr.bf16.mxu0 0
        %1359 = vmatpush1.bf16.xpose.msra.mxu0 0
        %1360 = vmatprep.subr.bf16.mxu0 0
        %1361 = vmatpush1.bf16.xpose.msra.mxu0 0
        %1362 = vmatprep.subr.bf16.mxu0 0
        %1363 = vmatpush1.bf16.xpose.msra.mxu0 0
        %1364 = vmatprep.subr.bf16.mxu0 0
        %1365 = vmatpush1.bf16.xpose.msra.mxu0 0
        %1366 = vmatprep.subr.bf16.mxu0 0
        %1367 = vmatpush1.bf16.xpose.msra.mxu0 0
        %1368 = vmatprep.subr.bf16.mxu0 0
        %1369 = vmatpush1.bf16.xpose.msra.mxu0 0
        %1370 = vmatprep.subr.bf16.mxu0 0
        %1371 = vmatpush1.bf16.xpose.msra.mxu0 0
        %1372 = vmatprep.subr.bf16.mxu0 0
        %1373 = vmatpush1.bf16.xpose.msra.mxu0 0
        %1374 = vmatprep.subr.bf16.mxu0 0
        %1375 = vmatpush1.bf16.xpose.msra.mxu0 0
        %1376 = vmatprep.subr.bf16.mxu0 0
        %1377 = vmatpush1.bf16.xpose.msra.mxu0 0
        %1378 = vmatprep.subr.bf16.mxu0 0
        %1379 = vmatpush1.bf16.xpose.msra.mxu0 0
        %1380 = vmatprep.subr.bf16.mxu0 0
        %1381 = vmatpush1.bf16.xpose.msra.mxu0 0
        %1382 = vmatprep.subr.bf16.mxu0 0
        %1383 = vmatpush1.bf16.xpose.msra.mxu0 0
        %1384 = vmatprep.subr.bf16.mxu0 0
        %1385 = vmatpush1.bf16.xpose.msra.mxu0 0
        %1386 = vmatprep.subr.bf16.mxu0 0
        %1387 = vmatpush1.bf16.xpose.msra.mxu0 0
        %1388 = vmatprep.mubr.bf16.mxu0 0
        %1389 = vmatmul.mubr.bf16.gmra.mrb[0].mxu0 %v1351
        %v1390 = vpop.f32.mrb[0].mxu0
        %v1391 = vadd.f32 0.0, %v1390
        %v1392 = vpop.f32.mrb[0].mxu0
        %v1393 = vpop.f32.mrb[0].mxu0
        %v1394 = vadd.f32 0.0, %v1393
        %v1395 = vpop.f32.mrb[0].mxu0
        %1396 = vdwg.mxu0
        %v1397 = vmul.f32 %v1250, 0.17677669
        %v1398 = vmul.f32 %v1253, 0.17677669
        %v1399 = vmul.f32 %v1297, 0.17677669
        %v1400 = vmul.f32 %v1300, 0.17677669
        %v1401 = vmul.f32 %v1344, 0.17677669
        %v1402 = vmul.f32 %v1347, 0.17677669
        %v1403 = vmul.f32 %v1391, 0.17677669
        %v1404 = vmul.f32 %v1394, 0.17677669
        %v1405 = vadd.f32 %v1397, %v894
        %v1406 = vadd.f32 %v1398, %v895
        %v1407 = vadd.f32 %v1399, %v894
        %v1408 = vadd.f32 %v1400, %v895
        %v1409 = vadd.f32 %v1401, %v894
        %v1410 = vadd.f32 %v1402, %v895
        %v1411 = vadd.f32 %v1403, %v894
        %v1412 = vadd.f32 %v1404, %v895
        %vm1413 = vcmask 130048
        %v1414 = vsel %vm1413, %v1405, -inf
        %1415 = vmax.xlane.f32.xlu0 %v1414
        %v1416 = vpop.xlane.xlu0 %1415
        %v1417 = vsel %vm1413, %v1406, -inf
        %1418 = vmax.xlane.f32.xlu0 %v1417
        %v1419 = vpop.xlane.xlu0 %1418
        %v1420 = vsel %vm1413, %v1407, -inf
        %1421 = vmax.xlane.f32.xlu0 %v1420
        %v1422 = vpop.xlane.xlu0 %1421
        %v1423 = vsel %vm1413, %v1408, -inf
        %1424 = vmax.xlane.f32.xlu0 %v1423
        %v1425 = vpop.xlane.xlu0 %1424
        %v1426 = vsel %vm1413, %v1409, -inf
        %1427 = vmax.xlane.f32.xlu0 %v1426
        %v1428 = vpop.xlane.xlu0 %1427
        %v1429 = vsel %vm1413, %v1410, -inf
        %1430 = vmax.xlane.f32.xlu0 %v1429
        %v1431 = vpop.xlane.xlu0 %1430
        %v1432 = vsel %vm1413, %v1411, -inf
        %1433 = vmax.xlane.f32.xlu0 %v1432
        %v1434 = vpop.xlane.xlu0 %1433
        %v1435 = vsel %vm1413, %v1412, -inf
        %1436 = vmax.xlane.f32.xlu0 %v1435
        %v1437 = vpop.xlane.xlu0 %1436
        %v1438 = vsub.f32 %v1405, %v1416
        %v1439 = vsub.f32 %v1406, %v1419
        %v1440 = vsub.f32 %v1407, %v1422
        %v1441 = vsub.f32 %v1408, %v1425
        %v1442 = vsub.f32 %v1409, %v1428
        %v1443 = vsub.f32 %v1410, %v1431
        %v1444 = vsub.f32 %v1411, %v1434
        %v1445 = vsub.f32 %v1412, %v1437
        %v1446 = vmul.f32 %v1438, 1.442695
        %v1447 = vpow.pop %v1446
        %v1448 = vmul.f32 %v1439, 1.442695
        %v1449 = vpow.pop %v1448
        %v1450 = vmul.f32 %v1440, 1.442695
        %v1451 = vpow.pop %v1450
        %v1452 = vmul.f32 %v1441, 1.442695
        %v1453 = vpow.pop %v1452
        %v1454 = vmul.f32 %v1442, 1.442695
        %v1455 = vpow.pop %v1454
        %v1456 = vmul.f32 %v1443, 1.442695
        %v1457 = vpow.pop %v1456
        %v1458 = vmul.f32 %v1444, 1.442695
        %v1459 = vpow.pop %v1458
        %v1460 = vmul.f32 %v1445, 1.442695
        %v1461 = vpow.pop %v1460
        %v1462 = vsel %vm1413, %v1447, 0.0
        %1463 = vadd.xlane.f32.xlu0 %v1462
        %v1464 = vpop.xlane.xlu0 %1463
        %v1465 = vsel %vm1413, %v1449, 0.0
        %1466 = vadd.xlane.f32.xlu0 %v1465
        %v1467 = vpop.xlane.xlu0 %1466
        %v1468 = vsel %vm1413, %v1451, 0.0
        %1469 = vadd.xlane.f32.xlu0 %v1468
        %v1470 = vpop.xlane.xlu0 %1469
        %v1471 = vsel %vm1413, %v1453, 0.0
        %1472 = vadd.xlane.f32.xlu0 %v1471
        %v1473 = vpop.xlane.xlu0 %1472
        %v1474 = vsel %vm1413, %v1455, 0.0
        %1475 = vadd.xlane.f32.xlu0 %v1474
        %v1476 = vpop.xlane.xlu0 %1475
        %v1477 = vsel %vm1413, %v1457, 0.0
        %1478 = vadd.xlane.f32.xlu0 %v1477
        %v1479 = vpop.xlane.xlu0 %1478
        %v1480 = vsel %vm1413, %v1459, 0.0
        %1481 = vadd.xlane.f32.xlu0 %v1480
        %v1482 = vpop.xlane.xlu0 %1481
        %v1483 = vsel %vm1413, %v1461, 0.0
        %1484 = vadd.xlane.f32.xlu0 %v1483
        %v1485 = vpop.xlane.xlu0 %1484
        %v1486 = vrcp.pop %v1464
        %v1487 = vrcp.pop %v1467
        %v1488 = vrcp.pop %v1470
        %v1489 = vrcp.pop %v1473
        %v1490 = vrcp.pop %v1476
        %v1491 = vrcp.pop %v1479
        %v1492 = vrcp.pop %v1482
        %v1493 = vrcp.pop %v1485
        %v1494 = vmul.f32 %v1447, %v1486
        %v1495 = vmul.f32 %v1449, %v1487
        %v1496 = vmul.f32 %v1451, %v1488
        %v1497 = vmul.f32 %v1453, %v1489
        %v1498 = vmul.f32 %v1455, %v1490
        %v1499 = vmul.f32 %v1457, %v1491
        %v1500 = vmul.f32 %v1459, %v1492
        %v1501 = vmul.f32 %v1461, %v1493
        %v1502 = vpack.c.bf16 %v1495, %v1494
        %v1503 = vpack.c.bf16 %v1497, %v1496
        %v1504 = vpack.c.bf16 %v1499, %v1498
        %v1505 = vpack.c.bf16 %v1501, %v1500
        %v1506 = vpack.c.bf16 %v1137, %v1134
        %v1507 = vpack.c.bf16 %v1185, %v1183
        %v1508 = vpack.c.bf16 %v1191, %v1189
        %v1509 = vpack.c.bf16 %v1197, %v1195
        %v1511 = vsel %vm1413, %v1502, 0
        %1513 = vmatprep.subr.bf16.mxu0 0
        %1514 = vmatpush1.bf16.msra.mxu0 %v1506
        %1515 = vmatprep.subr.bf16.mxu0 0
        %1516 = vmatpush1.bf16.msra.mxu0 0
        %1517 = vmatprep.subr.bf16.mxu0 0
        %1518 = vmatpush1.bf16.msra.mxu0 0
        %1519 = vmatprep.subr.bf16.mxu0 0
        %1520 = vmatpush1.bf16.msra.mxu0 0
        %1521 = vmatprep.subr.bf16.mxu0 0
        %1522 = vmatpush1.bf16.msra.mxu0 0
        %1523 = vmatprep.subr.bf16.mxu0 0
        %1524 = vmatpush1.bf16.msra.mxu0 0
        %1525 = vmatprep.subr.bf16.mxu0 0
        %1526 = vmatpush1.bf16.msra.mxu0 0
        %1527 = vmatprep.subr.bf16.mxu0 0
        %1528 = vmatpush1.bf16.msra.mxu0 0
        %1529 = vmatprep.subr.bf16.mxu0 0
        %1530 = vmatpush1.bf16.msra.mxu0 0
        %1531 = vmatprep.subr.bf16.mxu0 0
        %1532 = vmatpush1.bf16.msra.mxu0 0
        %1533 = vmatprep.subr.bf16.mxu0 0
        %1534 = vmatpush1.bf16.msra.mxu0 0
        %1535 = vmatprep.subr.bf16.mxu0 0
        %1536 = vmatpush1.bf16.msra.mxu0 0
        %1537 = vmatprep.subr.bf16.mxu0 0
        %1538 = vmatpush1.bf16.msra.mxu0 0
        %1539 = vmatprep.subr.bf16.mxu0 0
        %1540 = vmatpush1.bf16.msra.mxu0 0
        %1541 = vmatprep.subr.bf16.mxu0 0
        %1542 = vmatpush1.bf16.msra.mxu0 0
        %1543 = vmatprep.subr.bf16.mxu0 0
        %1544 = vmatpush1.bf16.msra.mxu0 0
        %1545 = vmatprep.mubr.bf16.mxu0 0
        %1546 = vmatmul.mubr.bf16.gmra.mrb[0].mxu0 %v1511
        %v1547 = vpop.f32.mrb[0].mxu0
        %v1548 = vadd.f32 0.0, %v1547
        %v1549 = vpop.f32.mrb[0].mxu0
        %v1550 = vpop.f32.mrb[0].mxu0
        %v1551 = vadd.f32 0.0, %v1550
        %v1552 = vpop.f32.mrb[0].mxu0
        %1553 = vdwg.mxu0
        %v1555 = vsel %vm1413, %v1503, 0
        %1557 = vmatprep.subr.bf16.mxu0 0
        %1558 = vmatpush1.bf16.msra.mxu0 %v1507
        %1559 = vmatprep.subr.bf16.mxu0 0
        %1560 = vmatpush1.bf16.msra.mxu0 0
        %1561 = vmatprep.subr.bf16.mxu0 0
        %1562 = vmatpush1.bf16.msra.mxu0 0
        %1563 = vmatprep.subr.bf16.mxu0 0
        %1564 = vmatpush1.bf16.msra.mxu0 0
        %1565 = vmatprep.subr.bf16.mxu0 0
        %1566 = vmatpush1.bf16.msra.mxu0 0
        %1567 = vmatprep.subr.bf16.mxu0 0
        %1568 = vmatpush1.bf16.msra.mxu0 0
        %1569 = vmatprep.subr.bf16.mxu0 0
        %1570 = vmatpush1.bf16.msra.mxu0 0
        %1571 = vmatprep.subr.bf16.mxu0 0
        %1572 = vmatpush1.bf16.msra.mxu0 0
        %1573 = vmatprep.subr.bf16.mxu0 0
        %1574 = vmatpush1.bf16.msra.mxu0 0
        %1575 = vmatprep.subr.bf16.mxu0 0
        %1576 = vmatpush1.bf16.msra.mxu0 0
        %1577 = vmatprep.subr.bf16.mxu0 0
        %1578 = vmatpush1.bf16.msra.mxu0 0
        %1579 = vmatprep.subr.bf16.mxu0 0
        %1580 = vmatpush1.bf16.msra.mxu0 0
        %1581 = vmatprep.subr.bf16.mxu0 0
        %1582 = vmatpush1.bf16.msra.mxu0 0
        %1583 = vmatprep.subr.bf16.mxu0 0
        %1584 = vmatpush1.bf16.msra.mxu0 0
        %1585 = vmatprep.subr.bf16.mxu0 0
        %1586 = vmatpush1.bf16.msra.mxu0 0
        %1587 = vmatprep.subr.bf16.mxu0 0
        %1588 = vmatpush1.bf16.msra.mxu0 0
        %1589 = vmatprep.mubr.bf16.mxu0 0
        %1590 = vmatmul.mubr.bf16.gmra.mrb[0].mxu0 %v1555
        %v1591 = vpop.f32.mrb[0].mxu0
        %v1592 = vadd.f32 0.0, %v1591
        %v1593 = vpop.f32.mrb[0].mxu0
        %v1594 = vpop.f32.mrb[0].mxu0
        %v1595 = vadd.f32 0.0, %v1594
        %v1596 = vpop.f32.mrb[0].mxu0
        %1597 = vdwg.mxu0
        %v1599 = vsel %vm1413, %v1504, 0
        %1601 = vmatprep.subr.bf16.mxu0 0
        %1602 = vmatpush1.bf16.msra.mxu0 %v1508
        %1603 = vmatprep.subr.bf16.mxu0 0
        %1604 = vmatpush1.bf16.msra.mxu0 0
        %1605 = vmatprep.subr.bf16.mxu0 0
        %1606 = vmatpush1.bf16.msra.mxu0 0
        %1607 = vmatprep.subr.bf16.mxu0 0
        %1608 = vmatpush1.bf16.msra.mxu0 0
        %1609 = vmatprep.subr.bf16.mxu0 0
        %1610 = vmatpush1.bf16.msra.mxu0 0
        %1611 = vmatprep.subr.bf16.mxu0 0
        %1612 = vmatpush1.bf16.msra.mxu0 0
        %1613 = vmatprep.subr.bf16.mxu0 0
        %1614 = vmatpush1.bf16.msra.mxu0 0
        %1615 = vmatprep.subr.bf16.mxu0 0
        %1616 = vmatpush1.bf16.msra.mxu0 0
        %1617 = vmatprep.subr.bf16.mxu0 0
        %1618 = vmatpush1.bf16.msra.mxu0 0
        %1619 = vmatprep.subr.bf16.mxu0 0
        %1620 = vmatpush1.bf16.msra.mxu0 0
        %1621 = vmatprep.subr.bf16.mxu0 0
        %1622 = vmatpush1.bf16.msra.mxu0 0
        %1623 = vmatprep.subr.bf16.mxu0 0
        %1624 = vmatpush1.bf16.msra.mxu0 0
        %1625 = vmatprep.subr.bf16.mxu0 0
        %1626 = vmatpush1.bf16.msra.mxu0 0
        %1627 = vmatprep.subr.bf16.mxu0 0
        %1628 = vmatpush1.bf16.msra.mxu0 0
        %1629 = vmatprep.subr.bf16.mxu0 0
        %1630 = vmatpush1.bf16.msra.mxu0 0
        %1631 = vmatprep.subr.bf16.mxu0 0
        %1632 = vmatpush1.bf16.msra.mxu0 0
        %1633 = vmatprep.mubr.bf16.mxu0 0
        %1634 = vmatmul.mubr.bf16.gmra.mrb[0].mxu0 %v1599
        %v1635 = vpop.f32.mrb[0].mxu0
        %v1636 = vadd.f32 0.0, %v1635
        %v1637 = vpop.f32.mrb[0].mxu0
        %v1638 = vpop.f32.mrb[0].mxu0
        %v1639 = vadd.f32 0.0, %v1638
        %v1640 = vpop.f32.mrb[0].mxu0
        %1641 = vdwg.mxu0
        %v1643 = vsel %vm1413, %v1505, 0
        %1645 = vmatprep.subr.bf16.mxu0 0
        %1646 = vmatpush1.bf16.msra.mxu0 %v1509
        %1647 = vmatprep.subr.bf16.mxu0 0
        %1648 = vmatpush1.bf16.msra.mxu0 0
        %1649 = vmatprep.subr.bf16.mxu0 0
        %1650 = vmatpush1.bf16.msra.mxu0 0
        %1651 = vmatprep.subr.bf16.mxu0 0
        %1652 = vmatpush1.bf16.msra.mxu0 0
        %1653 = vmatprep.subr.bf16.mxu0 0
        %1654 = vmatpush1.bf16.msra.mxu0 0
        %1655 = vmatprep.subr.bf16.mxu0 0
        %1656 = vmatpush1.bf16.msra.mxu0 0
        %1657 = vmatprep.subr.bf16.mxu0 0
        %1658 = vmatpush1.bf16.msra.mxu0 0
        %1659 = vmatprep.subr.bf16.mxu0 0
        %1660 = vmatpush1.bf16.msra.mxu0 0
        %1661 = vmatprep.subr.bf16.mxu0 0
        %1662 = vmatpush1.bf16.msra.mxu0 0
        %1663 = vmatprep.subr.bf16.mxu0 0
        %1664 = vmatpush1.bf16.msra.mxu0 0
        %1665 = vmatprep.subr.bf16.mxu0 0
        %1666 = vmatpush1.bf16.msra.mxu0 0
        %1667 = vmatprep.subr.bf16.mxu0 0
        %1668 = vmatpush1.bf16.msra.mxu0 0
        %1669 = vmatprep.subr.bf16.mxu0 0
        %1670 = vmatpush1.bf16.msra.mxu0 0
        %1671 = vmatprep.subr.bf16.mxu0 0
        %1672 = vmatpush1.bf16.msra.mxu0 0
        %1673 = vmatprep.subr.bf16.mxu0 0
        %1674 = vmatpush1.bf16.msra.mxu0 0
        %1675 = vmatprep.subr.bf16.mxu0 0
        %1676 = vmatpush1.bf16.msra.mxu0 0
        %1677 = vmatprep.mubr.bf16.mxu0 0
        %1678 = vmatmul.mubr.bf16.gmra.mrb[0].mxu0 %v1643
        %v1679 = vpop.f32.mrb[0].mxu0
        %v1680 = vadd.f32 0.0, %v1679
        %v1681 = vpop.f32.mrb[0].mxu0
        %v1682 = vpop.f32.mrb[0].mxu0
        %v1683 = vadd.f32 0.0, %v1682
        %v1684 = vpop.f32.mrb[0].mxu0
        %1685 = vdwg.mxu0
        %1688 = vrot.lane.b32.xlu0 %v1592, 32
        %v1689 = vpop.permute.xlu0 %1688
        %1690 = vrot.lane.b32.xlu0 %v1595, 32
        %v1691 = vpop.permute.xlu0 %1690
        %1696 = vrot.lane.b32.xlu0 %v1636, 64
        %v1697 = vpop.permute.xlu0 %1696
        %1698 = vrot.lane.b32.xlu0 %v1639, 64
        %v1699 = vpop.permute.xlu0 %1698
        %1704 = vrot.lane.b32.xlu0 %v1680, 96
        %v1705 = vpop.permute.xlu0 %1704
        %1706 = vrot.lane.b32.xlu0 %v1683, 96
        %v1707 = vpop.permute.xlu0 %1706
        %v1710 = vsel %vm1208, %v1548, %v1689
        %v1711 = vsel %vm1208, %v1551, %v1691
        %vm1712 = vcmask 523264
        %v1713 = vsel %vm1712, %v1710, %v1697
        %v1714 = vsel %vm1712, %v1711, %v1699
        %vm1715 = vcmask 785408
        %v1716 = vsel %vm1715, %v1713, %v1705
        %v1717 = vsel %vm1715, %v1714, %v1707
        %v1718 = vpack.c.bf16 %v1717, %v1716
        %v1719 = vld [vmem:[%s709] sm:$0xf]
        %v1720 = vld [vmem:[%s709 + $0x4] sm:$0xf]
        %v1721 = vld [vmem:[%s709 + $0x8] sm:$0xf]
        %v1722 = vld [vmem:[%s709 + $0xc] sm:$0xf]
        %v1723 = vld [vmem:[%s709 + $0x10] sm:$0xf]
        %v1724 = vld [vmem:[%s709 + $0x14] sm:$0xf]
        %v1725 = vld [vmem:[%s709 + $0x18] sm:$0xf]
        %v1726 = vld [vmem:[%s709 + $0x1c] sm:$0xf]
        %v1727 = vld [vmem:[%s709 + $0x20] sm:$0xf]
        %v1728 = vld [vmem:[%s709 + $0x24] sm:$0xf]
        %v1729 = vld [vmem:[%s709 + $0x28] sm:$0xf]
        %v1730 = vld [vmem:[%s709 + $0x2c] sm:$0xf]
        %v1731 = vld [vmem:[%s709 + $0x30] sm:$0xf]
        %v1732 = vld [vmem:[%s709 + $0x34] sm:$0xf]
        %v1733 = vld [vmem:[%s709 + $0x38] sm:$0xf]
        %v1734 = vld [vmem:[%s709 + $0x3c] sm:$0xf]
        %v1751 = vunpack.c.l.b16 %v1719
        %v1752 = vunpack.c.l.b16 %v1720
        %v1753 = vunpack.c.l.b16 %v1721
        %v1754 = vunpack.c.l.b16 %v1722
        %v1755 = vunpack.c.l.b16 %v1723
        %v1756 = vunpack.c.l.b16 %v1724
        %v1757 = vunpack.c.l.b16 %v1725
        %v1758 = vunpack.c.l.b16 %v1726
        %v1759 = vunpack.c.l.b16 %v1727
        %v1760 = vunpack.c.l.b16 %v1728
        %v1761 = vunpack.c.l.b16 %v1729
        %v1762 = vunpack.c.l.b16 %v1730
        %v1763 = vunpack.c.l.b16 %v1731
        %v1764 = vunpack.c.l.b16 %v1732
        %v1765 = vunpack.c.l.b16 %v1733
        %v1766 = vunpack.c.l.b16 %v1734
        %v1767 = vpack.c.b16 %v1752, %v1751
        %v1768 = vpack.c.b16 %v1754, %v1753
        %v1769 = vpack.c.b16 %v1756, %v1755
        %v1770 = vpack.c.b16 %v1758, %v1757
        %v1771 = vpack.c.b16 %v1760, %v1759
        %v1772 = vpack.c.b16 %v1762, %v1761
        %v1773 = vpack.c.b16 %v1764, %v1763
        %v1774 = vpack.c.b16 %v1766, %v1765
        %1783 = vmatprep.subr.bf16.mxu0 0
        %1784 = vmatpush1.bf16.msra.mxu0 %v1767
        %1785 = vmatprep.subr.bf16.mxu0 0
        %1786 = vmatpush1.bf16.msra.mxu0 %v1768
        %1787 = vmatprep.subr.bf16.mxu0 0
        %1788 = vmatpush1.bf16.msra.mxu0 %v1769
        %1789 = vmatprep.subr.bf16.mxu0 0
        %1790 = vmatpush1.bf16.msra.mxu0 %v1770
        %1791 = vmatprep.subr.bf16.mxu0 0
        %1792 = vmatpush1.bf16.msra.mxu0 %v1771
        %1793 = vmatprep.subr.bf16.mxu0 0
        %1794 = vmatpush1.bf16.msra.mxu0 %v1772
        %1795 = vmatprep.subr.bf16.mxu0 0
        %1796 = vmatpush1.bf16.msra.mxu0 %v1773
        %1797 = vmatprep.subr.bf16.mxu0 0
        %1798 = vmatpush1.bf16.msra.mxu0 %v1774
        %1799 = vmatprep.subr.bf16.mxu0 0
        %1800 = vmatpush1.bf16.msra.mxu0 0
        %1801 = vmatprep.subr.bf16.mxu0 0
        %1802 = vmatpush1.bf16.msra.mxu0 0
        %1803 = vmatprep.subr.bf16.mxu0 0
        %1804 = vmatpush1.bf16.msra.mxu0 0
        %1805 = vmatprep.subr.bf16.mxu0 0
        %1806 = vmatpush1.bf16.msra.mxu0 0
        %1807 = vmatprep.subr.bf16.mxu0 0
        %1808 = vmatpush1.bf16.msra.mxu0 0
        %1809 = vmatprep.subr.bf16.mxu0 0
        %1810 = vmatpush1.bf16.msra.mxu0 0
        %1811 = vmatprep.subr.bf16.mxu0 0
        %1812 = vmatpush1.bf16.msra.mxu0 0
        %1813 = vmatprep.subr.bf16.mxu0 0
        %1814 = vmatpush1.bf16.msra.mxu0 0
        %1815 = vmatprep.mubr.bf16.mxu0 0
        %1816 = vmatmul.mubr.bf16.gmra.mrb[0].mxu0 %v1718
        %v1817 = vpop.f32.mrb[0].mxu0
        %v1818 = vadd.f32 0.0, %v1817
        %v1819 = vpop.f32.mrb[0].mxu0
        %v1820 = vpop.f32.mrb[0].mxu0
        %v1821 = vadd.f32 0.0, %v1820
        %v1822 = vpop.f32.mrb[0].mxu0
        %1823 = vdwg.mxu0
        %v1824 = vadd.f32 %v891, %v1818
        %v1825 = vadd.f32 %v892, %v1821
        %v1826 = vld [vmem:[%s820] sm:$0x1]
        %v1827 = vld [vmem:[%s823] sm:$0x1]
        %1828 = vadd.xlane.f32.xlu0 %v1824
        %v1829 = vpop.xlane.xlu0 %1828
        %1830 = vadd.xlane.f32.xlu0 %v1825
        %v1831 = vpop.xlane.xlu0 %1830
        %v1832 = vrcp.pop 128.0
        %v1833 = vmul.f32 %v1829, %v1832
        %v1834 = vmul.f32 %v1831, %v1832
        %v1835 = vsub.f32 %v1824, %v1833
        %v1836 = vsub.f32 %v1825, %v1834
        %v1837 = vmul.f32 %v1835, %v1835
        %v1838 = vmul.f32 %v1836, %v1836
        %1839 = vadd.xlane.f32.xlu0 %v1837
        %v1840 = vpop.xlane.xlu0 %1839
        %1841 = vadd.xlane.f32.xlu0 %v1838
        %v1842 = vpop.xlane.xlu0 %1841
        %v1843 = vmul.f32 %v1840, %v1832
        %v1844 = vmul.f32 %v1842, %v1832
        %v1845 = vadd.f32 %v1843, 1e-06
        %v1846 = vadd.f32 %v1844, 1e-06
        %v1847 = vrsqrt.pop %v1845
        %v1848 = vrsqrt.pop %v1846
        %v1849 = vmul.f32 %v1835, %v1847
        %v1850 = vmul.f32 %v1836, %v1848
        %v1852 = vlaneseq
        %v1853 = vshrl.u32 %v1852, 7
        %v1854 = vsub.s32 0, %v1853
        %v1855 = vrot.slane %v1826, %v1854
        %v1857 = vmul.f32 %v1849, %v1855
        %v1858 = vmul.f32 %v1850, %v1855
        %v1860 = vlaneseq
        %v1861 = vshrl.u32 %v1860, 7
        %v1862 = vsub.s32 0, %v1861
        %v1863 = vrot.slane %v1827, %v1862
        %v1865 = vadd.f32 %v1857, %v1863
        %v1866 = vadd.f32 %v1858, %v1863
        %v1867 = vpack.c.bf16 %v1866, %v1865
        %v1868 = vld [vmem:[%s718] sm:$0xff]
        %v1869 = vld [vmem:[%s718 + $0x8] sm:$0xff]
        %v1870 = vld [vmem:[%s718 + $0x10] sm:$0xff]
        %v1871 = vld [vmem:[%s718 + $0x18] sm:$0xff]
        %v1872 = vld [vmem:[%s718 + $0x20] sm:$0xff]
        %v1873 = vld [vmem:[%s718 + $0x28] sm:$0xff]
        %v1874 = vld [vmem:[%s718 + $0x30] sm:$0xff]
        %v1875 = vld [vmem:[%s718 + $0x38] sm:$0xff]
        %v1876 = vld [vmem:[%s718 + $0x40] sm:$0xff]
        %v1877 = vld [vmem:[%s718 + $0x48] sm:$0xff]
        %v1878 = vld [vmem:[%s718 + $0x50] sm:$0xff]
        %v1879 = vld [vmem:[%s718 + $0x58] sm:$0xff]
        %v1880 = vld [vmem:[%s718 + $0x60] sm:$0xff]
        %v1881 = vld [vmem:[%s718 + $0x68] sm:$0xff]
        %v1882 = vld [vmem:[%s718 + $0x70] sm:$0xff]
        %v1883 = vld [vmem:[%s718 + $0x78] sm:$0xff]
        %v1884 = vld [vmem:[%s718 + $0x80] sm:$0xff]
        %v1885 = vld [vmem:[%s718 + $0x88] sm:$0xff]
        %v1886 = vld [vmem:[%s718 + $0x90] sm:$0xff]
        %v1887 = vld [vmem:[%s718 + $0x98] sm:$0xff]
        %v1888 = vld [vmem:[%s718 + $0xa0] sm:$0xff]
        %v1889 = vld [vmem:[%s718 + $0xa8] sm:$0xff]
        %v1890 = vld [vmem:[%s718 + $0xb0] sm:$0xff]
        %v1891 = vld [vmem:[%s718 + $0xb8] sm:$0xff]
        %v1892 = vld [vmem:[%s718 + $0xc0] sm:$0xff]
        %v1893 = vld [vmem:[%s718 + $0xc8] sm:$0xff]
        %v1894 = vld [vmem:[%s718 + $0xd0] sm:$0xff]
        %v1895 = vld [vmem:[%s718 + $0xd8] sm:$0xff]
        %v1896 = vld [vmem:[%s718 + $0xe0] sm:$0xff]
        %v1897 = vld [vmem:[%s718 + $0xe8] sm:$0xff]
        %v1898 = vld [vmem:[%s718 + $0xf0] sm:$0xff]
        %v1899 = vld [vmem:[%s718 + $0xf8] sm:$0xff]
        %v1900 = vld [vmem:[%s827] sm:$0xf]
        %v1902 = vlaneseq
        %v1903 = vshrl.u32 %v1902, 7
        %v1904 = vsub.s32 0, %v1903
        %v1905 = vrot.slane %v1900, %v1904
        %v1906 = vlaneseq
        %v1907 = vshrl.u32 %v1906, 7
        %v1908 = vsub.s32 1, %v1907
        %v1909 = vrot.slane %v1900, %v1908
        %v1910 = vlaneseq
        %v1911 = vshrl.u32 %v1910, 7
        %v1912 = vsub.s32 2, %v1911
        %v1913 = vrot.slane %v1900, %v1912
        %v1914 = vlaneseq
        %v1915 = vshrl.u32 %v1914, 7
        %v1916 = vsub.s32 3, %v1915
        %v1917 = vrot.slane %v1900, %v1916
        %v1954 = vunpack.c.l.b16 %v1868
        %v1955 = vunpack.c.h.b16 %v1868
        %v1956 = vunpack.c.l.b16 %v1869
        %v1957 = vunpack.c.h.b16 %v1869
        %v1958 = vunpack.c.l.b16 %v1870
        %v1959 = vunpack.c.h.b16 %v1870
        %v1960 = vunpack.c.l.b16 %v1871
        %v1961 = vunpack.c.h.b16 %v1871
        %v1962 = vunpack.c.l.b16 %v1872
        %v1963 = vunpack.c.h.b16 %v1872
        %v1964 = vunpack.c.l.b16 %v1873
        %v1965 = vunpack.c.h.b16 %v1873
        %v1966 = vunpack.c.l.b16 %v1874
        %v1967 = vunpack.c.h.b16 %v1874
        %v1968 = vunpack.c.l.b16 %v1875
        %v1969 = vunpack.c.h.b16 %v1875
        %v1970 = vunpack.c.l.b16 %v1876
        %v1971 = vunpack.c.h.b16 %v1876
        %v1972 = vunpack.c.l.b16 %v1877
        %v1973 = vunpack.c.h.b16 %v1877
        %v1974 = vunpack.c.l.b16 %v1878
        %v1975 = vunpack.c.h.b16 %v1878
        %v1976 = vunpack.c.l.b16 %v1879
        %v1977 = vunpack.c.h.b16 %v1879
        %v1978 = vunpack.c.l.b16 %v1880
        %v1979 = vunpack.c.h.b16 %v1880
        %v1980 = vunpack.c.l.b16 %v1881
        %v1981 = vunpack.c.h.b16 %v1881
        %v1982 = vunpack.c.l.b16 %v1882
        %v1983 = vunpack.c.h.b16 %v1882
        %v1984 = vunpack.c.l.b16 %v1883
        %v1985 = vunpack.c.h.b16 %v1883
        %v1986 = vunpack.c.l.b16 %v1884
        %v1987 = vunpack.c.h.b16 %v1884
        %v1988 = vunpack.c.l.b16 %v1885
        %v1989 = vunpack.c.h.b16 %v1885
        %v1990 = vunpack.c.l.b16 %v1886
        %v1991 = vunpack.c.h.b16 %v1886
        %v1992 = vunpack.c.l.b16 %v1887
        %v1993 = vunpack.c.h.b16 %v1887
        %v1994 = vunpack.c.l.b16 %v1888
        %v1995 = vunpack.c.h.b16 %v1888
        %v1996 = vunpack.c.l.b16 %v1889
        %v1997 = vunpack.c.h.b16 %v1889
        %v1998 = vunpack.c.l.b16 %v1890
        %v1999 = vunpack.c.h.b16 %v1890
        %v2000 = vunpack.c.l.b16 %v1891
        %v2001 = vunpack.c.h.b16 %v1891
        %v2002 = vunpack.c.l.b16 %v1892
        %v2003 = vunpack.c.h.b16 %v1892
        %v2004 = vunpack.c.l.b16 %v1893
        %v2005 = vunpack.c.h.b16 %v1893
        %v2006 = vunpack.c.l.b16 %v1894
        %v2007 = vunpack.c.h.b16 %v1894
        %v2008 = vunpack.c.l.b16 %v1895
        %v2009 = vunpack.c.h.b16 %v1895
        %v2010 = vunpack.c.l.b16 %v1896
        %v2011 = vunpack.c.h.b16 %v1896
        %v2012 = vunpack.c.l.b16 %v1897
        %v2013 = vunpack.c.h.b16 %v1897
        %v2014 = vunpack.c.l.b16 %v1898
        %v2015 = vunpack.c.h.b16 %v1898
        %v2016 = vunpack.c.l.b16 %v1899
        %v2017 = vunpack.c.h.b16 %v1899
        %v2018 = vpack.c.b16 %v1958, %v1954
        %v2019 = vpack.c.b16 %v1959, %v1955
        %v2020 = vpack.c.b16 %v1960, %v1956
        %v2021 = vpack.c.b16 %v1961, %v1957
        %v2022 = vpack.c.b16 %v1966, %v1962
        %v2023 = vpack.c.b16 %v1967, %v1963
        %v2024 = vpack.c.b16 %v1968, %v1964
        %v2025 = vpack.c.b16 %v1969, %v1965
        %v2026 = vpack.c.b16 %v1974, %v1970
        %v2027 = vpack.c.b16 %v1975, %v1971
        %v2028 = vpack.c.b16 %v1976, %v1972
        %v2029 = vpack.c.b16 %v1977, %v1973
        %v2030 = vpack.c.b16 %v1982, %v1978
        %v2031 = vpack.c.b16 %v1983, %v1979
        %v2032 = vpack.c.b16 %v1984, %v1980
        %v2033 = vpack.c.b16 %v1985, %v1981
        %v2034 = vpack.c.b16 %v1990, %v1986
        %v2035 = vpack.c.b16 %v1991, %v1987
        %v2036 = vpack.c.b16 %v1992, %v1988
        %v2037 = vpack.c.b16 %v1993, %v1989
        %v2038 = vpack.c.b16 %v1998, %v1994
        %v2039 = vpack.c.b16 %v1999, %v1995
        %v2040 = vpack.c.b16 %v2000, %v1996
        %v2041 = vpack.c.b16 %v2001, %v1997
        %v2042 = vpack.c.b16 %v2006, %v2002
        %v2043 = vpack.c.b16 %v2007, %v2003
        %v2044 = vpack.c.b16 %v2008, %v2004
        %v2045 = vpack.c.b16 %v2009, %v2005
        %v2046 = vpack.c.b16 %v2014, %v2010
        %v2047 = vpack.c.b16 %v2015, %v2011
        %v2048 = vpack.c.b16 %v2016, %v2012
        %v2049 = vpack.c.b16 %v2017, %v2013
        %2082 = vmatprep.subr.bf16.mxu0 %v2019
        %2083 = vmatpush1.bf16.msra.mxu0 %v2018
        %2084 = vmatprep.subr.bf16.mxu0 %v2023
        %2085 = vmatpush1.bf16.msra.mxu0 %v2022
        %2086 = vmatprep.subr.bf16.mxu0 %v2027
        %2087 = vmatpush1.bf16.msra.mxu0 %v2026
        %2088 = vmatprep.subr.bf16.mxu0 %v2031
        %2089 = vmatpush1.bf16.msra.mxu0 %v2030
        %2090 = vmatprep.subr.bf16.mxu0 %v2035
        %2091 = vmatpush1.bf16.msra.mxu0 %v2034
        %2092 = vmatprep.subr.bf16.mxu0 %v2039
        %2093 = vmatpush1.bf16.msra.mxu0 %v2038
        %2094 = vmatprep.subr.bf16.mxu0 %v2043
        %2095 = vmatpush1.bf16.msra.mxu0 %v2042
        %2096 = vmatprep.subr.bf16.mxu0 %v2047
        %2097 = vmatpush1.bf16.msra.mxu0 %v2046
        %2098 = vmatprep.subr.bf16.mxu0 0
        %2099 = vmatpush1.bf16.msra.mxu0 0
        %2100 = vmatprep.subr.bf16.mxu0 0
        %2101 = vmatpush1.bf16.msra.mxu0 0
        %2102 = vmatprep.subr.bf16.mxu0 0
        %2103 = vmatpush1.bf16.msra.mxu0 0
        %2104 = vmatprep.subr.bf16.mxu0 0
        %2105 = vmatpush1.bf16.msra.mxu0 0
        %2106 = vmatprep.subr.bf16.mxu0 0
        %2107 = vmatpush1.bf16.msra.mxu0 0
        %2108 = vmatprep.subr.bf16.mxu0 0
        %2109 = vmatpush1.bf16.msra.mxu0 0
        %2110 = vmatprep.subr.bf16.mxu0 0
        %2111 = vmatpush1.bf16.msra.mxu0 0
        %2112 = vmatprep.subr.bf16.mxu0 0
        %2113 = vmatpush1.bf16.msra.mxu0 0
        %2114 = vmatprep.mubr.bf16.mxu0 0
        %2115 = vmatmul.mubr.bf16.gmra.mrb[0].mxu0 %v1867
        %v2116 = vpop.f32.mrb[0].mxu0
        %v2117 = vadd.f32 %v1905, %v2116
        %v2118 = vpop.f32.mrb[0].mxu0
        %v2119 = vadd.f32 %v1909, %v2118
        %v2120 = vpop.f32.mrb[0].mxu0
        %v2121 = vadd.f32 %v1905, %v2120
        %v2122 = vpop.f32.mrb[0].mxu0
        %v2123 = vadd.f32 %v1909, %v2122
        %2124 = vdwg.mxu0
        %2125 = vmatprep.subr.bf16.mxu0 %v2021
        %2126 = vmatpush1.bf16.msra.mxu0 %v2020
        %2127 = vmatprep.subr.bf16.mxu0 %v2025
        %2128 = vmatpush1.bf16.msra.mxu0 %v2024
        %2129 = vmatprep.subr.bf16.mxu0 %v2029
        %2130 = vmatpush1.bf16.msra.mxu0 %v2028
        %2131 = vmatprep.subr.bf16.mxu0 %v2033
        %2132 = vmatpush1.bf16.msra.mxu0 %v2032
        %2133 = vmatprep.subr.bf16.mxu0 %v2037
        %2134 = vmatpush1.bf16.msra.mxu0 %v2036
        %2135 = vmatprep.subr.bf16.mxu0 %v2041
        %2136 = vmatpush1.bf16.msra.mxu0 %v2040
        %2137 = vmatprep.subr.bf16.mxu0 %v2045
        %2138 = vmatpush1.bf16.msra.mxu0 %v2044
        %2139 = vmatprep.subr.bf16.mxu0 %v2049
        %2140 = vmatpush1.bf16.msra.mxu0 %v2048
        %2141 = vmatprep.subr.bf16.mxu0 0
        %2142 = vmatpush1.bf16.msra.mxu0 0
        %2143 = vmatprep.subr.bf16.mxu0 0
        %2144 = vmatpush1.bf16.msra.mxu0 0
        %2145 = vmatprep.subr.bf16.mxu0 0
        %2146 = vmatpush1.bf16.msra.mxu0 0
        %2147 = vmatprep.subr.bf16.mxu0 0
        %2148 = vmatpush1.bf16.msra.mxu0 0
        %2149 = vmatprep.subr.bf16.mxu0 0
        %2150 = vmatpush1.bf16.msra.mxu0 0
        %2151 = vmatprep.subr.bf16.mxu0 0
        %2152 = vmatpush1.bf16.msra.mxu0 0
        %2153 = vmatprep.subr.bf16.mxu0 0
        %2154 = vmatpush1.bf16.msra.mxu0 0
        %2155 = vmatprep.subr.bf16.mxu0 0
        %2156 = vmatpush1.bf16.msra.mxu0 0
        %2157 = vmatprep.mubr.bf16.mxu0 0
        %2158 = vmatmul.mubr.bf16.gmra.mrb[0].mxu0 %v1867
        %v2159 = vpop.f32.mrb[0].mxu0
        %v2160 = vadd.f32 %v1913, %v2159
        %v2161 = vpop.f32.mrb[0].mxu0
        %v2162 = vadd.f32 %v1917, %v2161
        %v2163 = vpop.f32.mrb[0].mxu0
        %v2164 = vadd.f32 %v1913, %v2163
        %v2165 = vpop.f32.mrb[0].mxu0
        %v2166 = vadd.f32 %v1917, %v2165
        %2167 = vdwg.mxu0
        %v2168 = vmax.f32 %v2117, 0.0
        %v2169 = vmax.f32 %v2119, 0.0
        %v2170 = vmax.f32 %v2160, 0.0
        %v2171 = vmax.f32 %v2162, 0.0
        %v2172 = vmax.f32 %v2121, 0.0
        %v2173 = vmax.f32 %v2123, 0.0
        %v2174 = vmax.f32 %v2164, 0.0
        %v2175 = vmax.f32 %v2166, 0.0
        %v2176 = vpack.c.bf16 %v2172, %v2168
        %v2177 = vpack.c.bf16 %v2173, %v2169
        %v2178 = vpack.c.bf16 %v2174, %v2170
        %v2179 = vpack.c.bf16 %v2175, %v2171
        %v2180 = vld [vmem:[%s727] sm:$0xf]
        %v2181 = vld [vmem:[%s727 + $0x4] sm:$0xf]
        %v2182 = vld [vmem:[%s727 + $0x8] sm:$0xf]
        %v2183 = vld [vmem:[%s727 + $0xc] sm:$0xf]
        %v2184 = vld [vmem:[%s727 + $0x10] sm:$0xf]
        %v2185 = vld [vmem:[%s727 + $0x14] sm:$0xf]
        %v2186 = vld [vmem:[%s727 + $0x18] sm:$0xf]
        %v2187 = vld [vmem:[%s727 + $0x1c] sm:$0xf]
        %v2188 = vld [vmem:[%s727 + $0x20] sm:$0xf]
        %v2189 = vld [vmem:[%s727 + $0x24] sm:$0xf]
        %v2190 = vld [vmem:[%s727 + $0x28] sm:$0xf]
        %v2191 = vld [vmem:[%s727 + $0x2c] sm:$0xf]
        %v2192 = vld [vmem:[%s727 + $0x30] sm:$0xf]
        %v2193 = vld [vmem:[%s727 + $0x34] sm:$0xf]
        %v2194 = vld [vmem:[%s727 + $0x38] sm:$0xf]
        %v2195 = vld [vmem:[%s727 + $0x3c] sm:$0xf]
        %v2196 = vld [vmem:[%s727 + $0x40] sm:$0xf]
        %v2197 = vld [vmem:[%s727 + $0x44] sm:$0xf]
        %v2198 = vld [vmem:[%s727 + $0x48] sm:$0xf]
        %v2199 = vld [vmem:[%s727 + $0x4c] sm:$0xf]
        %v2200 = vld [vmem:[%s727 + $0x50] sm:$0xf]
        %v2201 = vld [vmem:[%s727 + $0x54] sm:$0xf]
        %v2202 = vld [vmem:[%s727 + $0x58] sm:$0xf]
        %v2203 = vld [vmem:[%s727 + $0x5c] sm:$0xf]
        %v2204 = vld [vmem:[%s727 + $0x60] sm:$0xf]
        %v2205 = vld [vmem:[%s727 + $0x64] sm:$0xf]
        %v2206 = vld [vmem:[%s727 + $0x68] sm:$0xf]
        %v2207 = vld [vmem:[%s727 + $0x6c] sm:$0xf]
        %v2208 = vld [vmem:[%s727 + $0x70] sm:$0xf]
        %v2209 = vld [vmem:[%s727 + $0x74] sm:$0xf]
        %v2210 = vld [vmem:[%s727 + $0x78] sm:$0xf]
        %v2211 = vld [vmem:[%s727 + $0x7c] sm:$0xf]
        %v2212 = vld [vmem:[%s727 + $0x80] sm:$0xf]
        %v2213 = vld [vmem:[%s727 + $0x84] sm:$0xf]
        %v2214 = vld [vmem:[%s727 + $0x88] sm:$0xf]
        %v2215 = vld [vmem:[%s727 + $0x8c] sm:$0xf]
        %v2216 = vld [vmem:[%s727 + $0x90] sm:$0xf]
        %v2217 = vld [vmem:[%s727 + $0x94] sm:$0xf]
        %v2218 = vld [vmem:[%s727 + $0x98] sm:$0xf]
        %v2219 = vld [vmem:[%s727 + $0x9c] sm:$0xf]
        %v2220 = vld [vmem:[%s727 + $0xa0] sm:$0xf]
        %v2221 = vld [vmem:[%s727 + $0xa4] sm:$0xf]
        %v2222 = vld [vmem:[%s727 + $0xa8] sm:$0xf]
        %v2223 = vld [vmem:[%s727 + $0xac] sm:$0xf]
        %v2224 = vld [vmem:[%s727 + $0xb0] sm:$0xf]
        %v2225 = vld [vmem:[%s727 + $0xb4] sm:$0xf]
        %v2226 = vld [vmem:[%s727 + $0xb8] sm:$0xf]
        %v2227 = vld [vmem:[%s727 + $0xbc] sm:$0xf]
        %v2228 = vld [vmem:[%s727 + $0xc0] sm:$0xf]
        %v2229 = vld [vmem:[%s727 + $0xc4] sm:$0xf]
        %v2230 = vld [vmem:[%s727 + $0xc8] sm:$0xf]
        %v2231 = vld [vmem:[%s727 + $0xcc] sm:$0xf]
        %v2232 = vld [vmem:[%s727 + $0xd0] sm:$0xf]
        %v2233 = vld [vmem:[%s727 + $0xd4] sm:$0xf]
        %v2234 = vld [vmem:[%s727 + $0xd8] sm:$0xf]
        %v2235 = vld [vmem:[%s727 + $0xdc] sm:$0xf]
        %v2236 = vld [vmem:[%s727 + $0xe0] sm:$0xf]
        %v2237 = vld [vmem:[%s727 + $0xe4] sm:$0xf]
        %v2238 = vld [vmem:[%s727 + $0xe8] sm:$0xf]
        %v2239 = vld [vmem:[%s727 + $0xec] sm:$0xf]
        %v2240 = vld [vmem:[%s727 + $0xf0] sm:$0xf]
        %v2241 = vld [vmem:[%s727 + $0xf4] sm:$0xf]
        %v2242 = vld [vmem:[%s727 + $0xf8] sm:$0xf]
        %v2243 = vld [vmem:[%s727 + $0xfc] sm:$0xf]
        %v2244 = vld [vmem:[%s830] sm:$0x1]
        %v2246 = vlaneseq
        %v2247 = vshrl.u32 %v2246, 7
        %v2248 = vsub.s32 0, %v2247
        %v2249 = vrot.slane %v2244, %v2248
        %v2315 = vunpack.c.l.b16 %v2180
        %v2316 = vunpack.c.l.b16 %v2181
        %v2317 = vunpack.c.l.b16 %v2182
        %v2318 = vunpack.c.l.b16 %v2183
        %v2319 = vunpack.c.l.b16 %v2184
        %v2320 = vunpack.c.l.b16 %v2185
        %v2321 = vunpack.c.l.b16 %v2186
        %v2322 = vunpack.c.l.b16 %v2187
        %v2323 = vunpack.c.l.b16 %v2188
        %v2324 = vunpack.c.l.b16 %v2189
        %v2325 = vunpack.c.l.b16 %v2190
        %v2326 = vunpack.c.l.b16 %v2191
        %v2327 = vunpack.c.l.b16 %v2192
        %v2328 = vunpack.c.l.b16 %v2193
        %v2329 = vunpack.c.l.b16 %v2194
        %v2330 = vunpack.c.l.b16 %v2195
        %v2331 = vunpack.c.l.b16 %v2196
        %v2332 = vunpack.c.l.b16 %v2197
        %v2333 = vunpack.c.l.b16 %v2198
        %v2334 = vunpack.c.l.b16 %v2199
        %v2335 = vunpack.c.l.b16 %v2200
        %v2336 = vunpack.c.l.b16 %v2201
        %v2337 = vunpack.c.l.b16 %v2202
        %v2338 = vunpack.c.l.b16 %v2203
        %v2339 = vunpack.c.l.b16 %v2204
        %v2340 = vunpack.c.l.b16 %v2205
        %v2341 = vunpack.c.l.b16 %v2206
        %v2342 = vunpack.c.l.b16 %v2207
        %v2343 = vunpack.c.l.b16 %v2208
        %v2344 = vunpack.c.l.b16 %v2209
        %v2345 = vunpack.c.l.b16 %v2210
        %v2346 = vunpack.c.l.b16 %v2211
        %v2347 = vunpack.c.l.b16 %v2212
        %v2348 = vunpack.c.l.b16 %v2213
        %v2349 = vunpack.c.l.b16 %v2214
        %v2350 = vunpack.c.l.b16 %v2215
        %v2351 = vunpack.c.l.b16 %v2216
        %v2352 = vunpack.c.l.b16 %v2217
        %v2353 = vunpack.c.l.b16 %v2218
        %v2354 = vunpack.c.l.b16 %v2219
        %v2355 = vunpack.c.l.b16 %v2220
        %v2356 = vunpack.c.l.b16 %v2221
        %v2357 = vunpack.c.l.b16 %v2222
        %v2358 = vunpack.c.l.b16 %v2223
        %v2359 = vunpack.c.l.b16 %v2224
        %v2360 = vunpack.c.l.b16 %v2225
        %v2361 = vunpack.c.l.b16 %v2226
        %v2362 = vunpack.c.l.b16 %v2227
        %v2363 = vunpack.c.l.b16 %v2228
        %v2364 = vunpack.c.l.b16 %v2229
        %v2365 = vunpack.c.l.b16 %v2230
        %v2366 = vunpack.c.l.b16 %v2231
        %v2367 = vunpack.c.l.b16 %v2232
        %v2368 = vunpack.c.l.b16 %v2233
        %v2369 = vunpack.c.l.b16 %v2234
        %v2370 = vunpack.c.l.b16 %v2235
        %v2371 = vunpack.c.l.b16 %v2236
        %v2372 = vunpack.c.l.b16 %v2237
        %v2373 = vunpack.c.l.b16 %v2238
        %v2374 = vunpack.c.l.b16 %v2239
        %v2375 = vunpack.c.l.b16 %v2240
        %v2376 = vunpack.c.l.b16 %v2241
        %v2377 = vunpack.c.l.b16 %v2242
        %v2378 = vunpack.c.l.b16 %v2243
        %v2379 = vpack.c.b16 %v2316, %v2315
        %v2380 = vpack.c.b16 %v2318, %v2317
        %v2381 = vpack.c.b16 %v2320, %v2319
        %v2382 = vpack.c.b16 %v2322, %v2321
        %v2383 = vpack.c.b16 %v2324, %v2323
        %v2384 = vpack.c.b16 %v2326, %v2325
        %v2385 = vpack.c.b16 %v2328, %v2327
        %v2386 = vpack.c.b16 %v2330, %v2329
        %v2387 = vpack.c.b16 %v2332, %v2331
        %v2388 = vpack.c.b16 %v2334, %v2333
        %v2389 = vpack.c.b16 %v2336, %v2335
        %v2390 = vpack.c.b16 %v2338, %v2337
        %v2391 = vpack.c.b16 %v2340, %v2339
        %v2392 = vpack.c.b16 %v2342, %v2341
        %v2393 = vpack.c.b16 %v2344, %v2343
        %v2394 = vpack.c.b16 %v2346, %v2345
        %v2395 = vpack.c.b16 %v2348, %v2347
        %v2396 = vpack.c.b16 %v2350, %v2349
        %v2397 = vpack.c.b16 %v2352, %v2351
        %v2398 = vpack.c.b16 %v2354, %v2353
        %v2399 = vpack.c.b16 %v2356, %v2355
        %v2400 = vpack.c.b16 %v2358, %v2357
        %v2401 = vpack.c.b16 %v2360, %v2359
        %v2402 = vpack.c.b16 %v2362, %v2361
        %v2403 = vpack.c.b16 %v2364, %v2363
        %v2404 = vpack.c.b16 %v2366, %v2365
        %v2405 = vpack.c.b16 %v2368, %v2367
        %v2406 = vpack.c.b16 %v2370, %v2369
        %v2407 = vpack.c.b16 %v2372, %v2371
        %v2408 = vpack.c.b16 %v2374, %v2373
        %v2409 = vpack.c.b16 %v2376, %v2375
        %v2410 = vpack.c.b16 %v2378, %v2377
        %2443 = vmatprep.subr.bf16.mxu0 0
        %2444 = vmatpush1.bf16.msra.mxu0 %v2379
        %2445 = vmatprep.subr.bf16.mxu0 0
        %2446 = vmatpush1.bf16.msra.mxu0 %v2380
        %2447 = vmatprep.subr.bf16.mxu0 0
        %2448 = vmatpush1.bf16.msra.mxu0 %v2381
        %2449 = vmatprep.subr.bf16.mxu0 0
        %2450 = vmatpush1.bf16.msra.mxu0 %v2382
        %2451 = vmatprep.subr.bf16.mxu0 0
        %2452 = vmatpush1.bf16.msra.mxu0 %v2383
        %2453 = vmatprep.subr.bf16.mxu0 0
        %2454 = vmatpush1.bf16.msra.mxu0 %v2384
        %2455 = vmatprep.subr.bf16.mxu0 0
        %2456 = vmatpush1.bf16.msra.mxu0 %v2385
        %2457 = vmatprep.subr.bf16.mxu0 0
        %2458 = vmatpush1.bf16.msra.mxu0 %v2386
        %2459 = vmatprep.subr.bf16.mxu0 0
        %2460 = vmatpush1.bf16.msra.mxu0 %v2387
        %2461 = vmatprep.subr.bf16.mxu0 0
        %2462 = vmatpush1.bf16.msra.mxu0 %v2388
        %2463 = vmatprep.subr.bf16.mxu0 0
        %2464 = vmatpush1.bf16.msra.mxu0 %v2389
        %2465 = vmatprep.subr.bf16.mxu0 0
        %2466 = vmatpush1.bf16.msra.mxu0 %v2390
        %2467 = vmatprep.subr.bf16.mxu0 0
        %2468 = vmatpush1.bf16.msra.mxu0 %v2391
        %2469 = vmatprep.subr.bf16.mxu0 0
        %2470 = vmatpush1.bf16.msra.mxu0 %v2392
        %2471 = vmatprep.subr.bf16.mxu0 0
        %2472 = vmatpush1.bf16.msra.mxu0 %v2393
        %2473 = vmatprep.subr.bf16.mxu0 0
        %2474 = vmatpush1.bf16.msra.mxu0 %v2394
        %2475 = vmatprep.mubr.bf16.mxu0 %v2177
        %2476 = vmatmul.mubr.bf16.gmra.mrb[0].mxu0 %v2176
        %v2477 = vpop.f32.mrb[0].mxu0
        %v2478 = vadd.f32 %v2249, %v2477
        %v2479 = vpop.f32.mrb[0].mxu0
        %v2480 = vpop.f32.mrb[0].mxu0
        %v2481 = vadd.f32 %v2249, %v2480
        %v2482 = vpop.f32.mrb[0].mxu0
        %2483 = vdwg.mxu0
        %2484 = vmatprep.subr.bf16.mxu0 0
        %2485 = vmatpush1.bf16.msra.mxu0 %v2395
        %2486 = vmatprep.subr.bf16.mxu0 0
        %2487 = vmatpush1.bf16.msra.mxu0 %v2396
        %2488 = vmatprep.subr.bf16.mxu0 0
        %2489 = vmatpush1.bf16.msra.mxu0 %v2397
        %2490 = vmatprep.subr.bf16.mxu0 0
        %2491 = vmatpush1.bf16.msra.mxu0 %v2398
        %2492 = vmatprep.subr.bf16.mxu0 0
        %2493 = vmatpush1.bf16.msra.mxu0 %v2399
        %2494 = vmatprep.subr.bf16.mxu0 0
        %2495 = vmatpush1.bf16.msra.mxu0 %v2400
        %2496 = vmatprep.subr.bf16.mxu0 0
        %2497 = vmatpush1.bf16.msra.mxu0 %v2401
        %2498 = vmatprep.subr.bf16.mxu0 0
        %2499 = vmatpush1.bf16.msra.mxu0 %v2402
        %2500 = vmatprep.subr.bf16.mxu0 0
        %2501 = vmatpush1.bf16.msra.mxu0 %v2403
        %2502 = vmatprep.subr.bf16.mxu0 0
        %2503 = vmatpush1.bf16.msra.mxu0 %v2404
        %2504 = vmatprep.subr.bf16.mxu0 0
        %2505 = vmatpush1.bf16.msra.mxu0 %v2405
        %2506 = vmatprep.subr.bf16.mxu0 0
        %2507 = vmatpush1.bf16.msra.mxu0 %v2406
        %2508 = vmatprep.subr.bf16.mxu0 0
        %2509 = vmatpush1.bf16.msra.mxu0 %v2407
        %2510 = vmatprep.subr.bf16.mxu0 0
        %2511 = vmatpush1.bf16.msra.mxu0 %v2408
        %2512 = vmatprep.subr.bf16.mxu0 0
        %2513 = vmatpush1.bf16.msra.mxu0 %v2409
        %2514 = vmatprep.subr.bf16.mxu0 0
        %2515 = vmatpush1.bf16.msra.mxu0 %v2410
        %2516 = vmatprep.mubr.bf16.mxu0 %v2179
        %2517 = vmatmul.mubr.bf16.gmra.mrb[0].mxu0 %v2178
        %v2518 = vpop.f32.mrb[0].mxu0
        %v2519 = vadd.f32 %v2478, %v2518
        %v2520 = vpop.f32.mrb[0].mxu0
        %v2521 = vpop.f32.mrb[0].mxu0
        %v2522 = vadd.f32 %v2481, %v2521
        %v2523 = vpop.f32.mrb[0].mxu0
        %2524 = vdwg.mxu0
        %v2525 = vadd.f32 %v1865, %v2519
        %v2526 = vadd.f32 %v1866, %v2522
        %v2527 = vld [vmem:[%s833] sm:$0x1]
        %v2528 = vld [vmem:[%s836] sm:$0x1]
        %2529 = vadd.xlane.f32.xlu0 %v2525
        %v2530 = vpop.xlane.xlu0 %2529
        %2531 = vadd.xlane.f32.xlu0 %v2526
        %v2532 = vpop.xlane.xlu0 %2531
        %v2533 = vmul.f32 %v2530, %v1832
        %v2534 = vmul.f32 %v2532, %v1832
        %v2535 = vsub.f32 %v2525, %v2533
        %v2536 = vsub.f32 %v2526, %v2534
        %v2537 = vmul.f32 %v2535, %v2535
        %v2538 = vmul.f32 %v2536, %v2536
        %2539 = vadd.xlane.f32.xlu0 %v2537
        %v2540 = vpop.xlane.xlu0 %2539
        %2541 = vadd.xlane.f32.xlu0 %v2538
        %v2542 = vpop.xlane.xlu0 %2541
        %v2543 = vmul.f32 %v2540, %v1832
        %v2544 = vmul.f32 %v2542, %v1832
        %v2545 = vadd.f32 %v2543, 1e-06
        %v2546 = vadd.f32 %v2544, 1e-06
        %v2547 = vrsqrt.pop %v2545
        %v2548 = vrsqrt.pop %v2546
        %v2549 = vmul.f32 %v2535, %v2547
        %v2550 = vmul.f32 %v2536, %v2548
        %v2552 = vlaneseq
        %v2553 = vshrl.u32 %v2552, 7
        %v2554 = vsub.s32 0, %v2553
        %v2555 = vrot.slane %v2527, %v2554
        %v2557 = vmul.f32 %v2549, %v2555
        %v2558 = vmul.f32 %v2550, %v2555
        %v2560 = vlaneseq
        %v2561 = vshrl.u32 %v2560, 7
        %v2562 = vsub.s32 0, %v2561
        %v2563 = vrot.slane %v2528, %v2562
        %v2565 = vadd.f32 %v2557, %v2563
        %v2566 = vadd.f32 %v2558, %v2563
        %2567 = vst [vmem:[#allocation2] sm:$0xff] %v2565
        %2568 = vst [vmem:[#allocation2 + $0x8] sm:$0xff] %v2566
        %p2569 = scmp.eq.s32.totalorder %s39, 1
        // Predicated region
        $region121: #{tpu_custom_call.1} parent=79 // pred_check
          %p2570 = pneg %p2569
        $region122: #{tpu_custom_call.1} parent=79 // pred_check_branch
          %2572 = sbr.rel (%p2570) target = $region124
        $region123: #{tpu_custom_call.1} parent=79 // pred_region
          %2573 = vst [vmem:[%s817] sm:$0xff] %v2565
          %2574 = vst [vmem:[%s817 + $0x8] sm:$0xff] %v2566
        $region124: #{tpu_custom_call.1} parent=79 // pred_fallthru
          _
        %s2575 = sand.u32 %s429, 1
        %s2576 = scalar_lea.sflag [#allocation5], %s2575
        %s2577 = sand.u32 %s429, 1
        %s2578 = smul.addr %s2577, 16
        %s2579 = scalar_lea.vmem [#allocation16], %s2578
        // Predicated region
        $region125: #{tpu_custom_call.1} parent=79 // pred_check
          %p2580 = pneg %p439
        $region126: #{tpu_custom_call.1} parent=79 // pred_check_branch
          %2582 = sbr.rel (%p2580) target = $region128
        $region127: #{tpu_custom_call.1} parent=79 // pred_region
          %s2584 = ssub.s32 256, 256
          %2585 = vsyncadd %s2576, %s2584
          %s2586 = smul.addr %s38, 2
          %s2587 = smul.addr %s2586, 128
          %s2588 = scalar_lea.hbm %s15, %s2587
          %s2589 = sshll.u32 %s2579, 4
          %s2590 = int_to_ptr.vmem [resolvable:$true] %s2589
          %2595 = dma.vmem_to_hbm [thread:$0]  %s2590, 256, %s2588, %s2576, 128, 128, 8
        $region128: #{tpu_custom_call.1} parent=79 // pred_fallthru
          _
      $region80: #{tpu_custom_call.1} parent=5 // pred_fallthru
        _
      %p2596 = scmp.le.s32.totalorder 2, %s29
      // Predicated region
      $region129: #{tpu_custom_call.1} parent=5 // pred_check
        %p2597 = pneg %p2596
      $region130: #{tpu_custom_call.1} parent=5 // pred_check_branch
        %2599 = sbr.rel (%p2597) target = $region132
      $region131: #{tpu_custom_call.1} parent=5 // pred_region
        %s2600 = ssub.s32 %s29, 2
        // Predicated region
        $region133: #{tpu_custom_call.1} parent=131 // pred_check
          %p2601 = pneg %p445
        $region134: #{tpu_custom_call.1} parent=131 // pred_check_branch
          %2603 = sbr.rel (%p2601) target = $region136
        $region135: #{tpu_custom_call.1} parent=131 // pred_region
          %s2604 = sand.u32 %s430, 1
          %s2605 = scalar_lea.sflag [#allocation5], %s2604
          %s2606 = sand.u32 %s430, 1
          %s2607 = smul.addr %s2606, 16
          %s2608 = scalar_lea.vmem [#allocation16], %s2607
          %2609 = dma.done %s2605, 256
        $region136: #{tpu_custom_call.1} parent=131 // pred_fallthru
          _
      $region132: #{tpu_custom_call.1} parent=5 // pred_fallthru
        _
    $region6: #{tpu_custom_call.1} parent=1 // loop_footer
      %s33 = sadd.s32 1, %s29
    $region7: #{tpu_custom_call.1} parent=1 // loop_footer_branch
      %28 = sbr.rel target = $region3
    $region8: #{tpu_custom_call.1} parent=1 // loop_exit
      _
    %2610 = vsyncpa [#allocation4], 1
    %s2611 = scalar_lea.sflag [#allocation4], 1
    %2612 = vsyncpa %s2611, 1
    %2613 = vsyncpa [#allocation7], 1
    %2614 = vsyncpa [#allocation10], 1
    %2615 = vsyncpa [#allocation5], 1
    %s2616 = scalar_lea.sflag [#allocation5], 1
    %2617 = vsyncpa %s2616, 1

</llo_original>
